<compile_context>
chip_gen: v6e
topology: v6e:2x2x1
jax: 0.10.0
libtpu: 0.0.40
codegen_flags: <defaults>
</compile_context>

<pallas_src>
import jax
import jax.numpy as jnp
from jax.experimental import pallas as pl
from jax.experimental.pallas import tpu as pltpu

# ----------------------------- config (synthetic) ---------------------------
B = 2                 # batch size
IMG_C, IMG_H, IMG_W = 3, 32, 32
PATCH = 8             # backbone stride (single FPN level "p3", stride 8)
FEAT_C = 128          # backbone output channels
NUM_CLASSES = 8
FH, FW = IMG_H // PATCH, IMG_W // PATCH       # feature map spatial dims (4, 4)
PATCH_DIM = IMG_C * PATCH * PATCH             # 192
HEAD_PAD = 128                                # lane-dense packed head width

PIXEL_MEAN = jnp.array([103.530, 116.280, 123.675], dtype=jnp.float32)
PIXEL_STD = jnp.array([57.375, 57.120, 58.395], dtype=jnp.float32)

# packed head layout: (output name, source tower slot {0:cls,1:box,2:f3},
#                      width, raw-param key prefix)
_HEAD_DEFS = (
    ("logits",       0, NUM_CLASSES, "cls_logits"),
    ("box2d_reg",    1, 4,           "box2d"),
    ("centerness",   1, 1,           "ctr"),
    ("box3d_quat",   2, 4,           "quat"),
    ("box3d_ctr",    2, 2,           "ctr3d"),
    ("box3d_depth",  2, 1,           "depth"),
    ("box3d_size",   2, 3,           "size"),
    ("box3d_conf",   2, 1,           "conf"),
    ("dense_depth",  2, 1,           "dense_depth"),
)


def _head_slices():
    slices, off = {}, 0
    for name, _, width, _ in _HEAD_DEFS:
        slices[name] = (off, off + width)
        off += width
    assert off <= HEAD_PAD
    return slices


HEAD_SLICES = _head_slices()
_BOX2D_LO, _BOX2D_HI = HEAD_SLICES["box2d_reg"]

# row offsets inside the (W128_ROWS, 128) packed weight slab (all 16-aligned)
W128_BB = 0                                   # backbone patch-embed (192 rows)
W128_TEMP = W128_BB + PATCH_DIM               # temporal proj        (128 rows)
W128_T1 = W128_TEMP + FEAT_C                  # 3x tower layer-1     (384 rows)
W128_HEADS = W128_T1 + 3 * FEAT_C             # merged heads, K=384  (384 rows)
W128_ROWS = W128_HEADS + 3 * FEAT_C           # 1088


# ------------------------------- Pallas kernel -------------------------------
def _dd3d_fused_kernel(p_ref, w128_ref, w384_ref, bias_ref, feat_ref, heads_ref):
    f32 = jnp.float32
    bf16 = jnp.bfloat16
    tm = p_ref.shape[1]

    bm = bias_ref[...]                              # (8, 384) f32, tiny
    bb_b = bm[0:1, 0:FEAT_C]
    temp_b = bm[1:2, 0:FEAT_C]
    t0_b = bm[2:3, :]
    t1_b = (bm[3:4, 0:FEAT_C], bm[4:5, 0:FEAT_C], bm[5:6, 0:FEAT_C])
    heads_b = bm[6:7, 0:HEAD_PAD]
    relu_mask = bm[7:8, 0:HEAD_PAD] > 0.5           # box2d_reg columns

    # --- backbone patch-embed: all 3 frames in ONE MXU contraction ----------
    # (preprocess (x-mean)/std already folded into the packed weights/bias)
    p_all = p_ref[...].reshape(3 * tm, PATCH_DIM)   # bf16, free sublane stack
    feat_all = jnp.dot(p_all, w128_ref[W128_BB:W128_BB + PATCH_DIM, :],
                       preferred_element_type=f32) + bb_b
    feat_all = jnp.maximum(feat_all, 0.0)
    feat_cur = feat_all[0:tm]
    prev_mean = (feat_all[tm:2 * tm] + feat_all[2 * tm:3 * tm]) * 0.5

    # --- temporal head (simplified DeformableTransformer): proj + residual --
    fused = feat_cur + (
        jnp.dot(prev_mean.astype(bf16),
                w128_ref[W128_TEMP:W128_TEMP + FEAT_C, :],
                preferred_element_type=f32) + temp_b)
    feat_ref[...] = fused.astype(feat_ref.dtype)

    # --- tower layer 0: cls/box/f3 lane-concatenated, one (tm,128)@(128,384) -
    h0 = jnp.maximum(
        jnp.dot(fused.astype(bf16), w384_ref[...],
                preferred_element_type=f32) + t0_b, 0.0).astype(bf16)

    # --- tower layer 1: per-tower dots, results lane-concatenated to (tm,384)
    h1 = []
    for s in range(3):
        w = w128_ref[W128_T1 + s * FEAT_C:W128_T1 + (s + 1) * FEAT_C, :]
        h = jnp.dot(h0[:, s * FEAT_C:(s + 1) * FEAT_C], w,
                    preferred_element_type=f32) + t1_b[s]
        h1.append(jnp.maximum(h, 0.0).astype(bf16))
    h_all = jnp.concatenate(h1, axis=1)             # (tm, 384) bf16

    # --- ALL heads as ONE K=384 contraction into the lane-dense 128 slab ----
    heads = jnp.dot(h_all, w128_ref[W128_HEADS:W128_HEADS + 3 * FEAT_C, :],
                    preferred_element_type=f32) + heads_b
    # box2d_reg columns use ReLU; every other head is linear.
    heads = jnp.where(relu_mask, jnp.maximum(heads, 0.0), heads)
    heads_ref[...] = heads.astype(heads_ref.dtype)


# ------------------------------ parameter init -------------------------------
def _dense_init(key, k, n, scale=0.02):
    wk, _ = jax.random.split(key)
    return (jax.random.normal(wk, (k, n), jnp.float32) * scale,
            jnp.zeros((n,), jnp.float32))


def init_params(seed=0):
    key = jax.random.PRNGKey(seed)
    keys = jax.random.split(key, 32)
    p = {}
    ki = iter(range(32))
    # backbone (patch-embed conv, stride 8)
    p["bb_w"], p["bb_b"] = _dense_init(keys[next(ki)], PATCH_DIM, FEAT_C)
    # temporal head projection
    p["temporal_w"], p["temporal_b"] = _dense_init(keys[next(ki)], FEAT_C, FEAT_C)
    # fcos2d towers (2 layers each) + heads
    for i in range(2):
        p[f"cls_tower_w{i}"], p[f"cls_tower_b{i}"] = _dense_init(keys[next(ki)], FEAT_C, FEAT_C)
        p[f"box_tower_w{i}"], p[f"box_tower_b{i}"] = _dense_init(keys[next(ki)], FEAT_C, FEAT_C)
    p["cls_logits_w"], p["cls_logits_b"] = _dense_init(keys[next(ki)], FEAT_C, NUM_CLASSES)
    p["box2d_w"], p["box2d_b"] = _dense_init(keys[next(ki)], FEAT_C, 4)
    p["ctr_w"], p["ctr_b"] = _dense_init(keys[next(ki)], FEAT_C, 1)
    # fcos3d tower + heads
    for i in range(2):
        p[f"f3_tower_w{i}"], p[f"f3_tower_b{i}"] = _dense_init(keys[next(ki)], FEAT_C, FEAT_C)
    p["quat_w"], p["quat_b"] = _dense_init(keys[next(ki)], FEAT_C, 4)
    p["ctr3d_w"], p["ctr3d_b"] = _dense_init(keys[next(ki)], FEAT_C, 2)
    p["depth_w"], p["depth_b"] = _dense_init(keys[next(ki)], FEAT_C, 1)
    p["size_w"], p["size_b"] = _dense_init(keys[next(ki)], FEAT_C, 3)
    p["conf_w"], p["conf_b"] = _dense_init(keys[next(ki)], FEAT_C, 1)
    p["dense_depth_w"], p["dense_depth_b"] = _dense_init(keys[next(ki)], FEAT_C, 1)
    p["pixel_mean"] = PIXEL_MEAN
    p["pixel_std"] = PIXEL_STD
    return p


def pack_params(p):
    """Fold preprocess into backbone weights (in f32) and pack everything into
    three contiguous slabs: w128 (1088,128) bf16, w384 (128,384) bf16 and a
    bias+mask slab (8,384) f32."""
    f32, bf16 = jnp.float32, jnp.bfloat16

    # exact affine fold:  (x - m)/s @ W == x @ (W * 1/s) - (m/s) @ W
    inv_std = (1.0 / p["pixel_std"]).astype(f32)                      # (3,)
    scale = jnp.repeat(inv_std, PATCH * PATCH)                        # (192,)
    shift = jnp.repeat(p["pixel_mean"].astype(f32) * inv_std, PATCH * PATCH)
    bb_w = p["bb_w"] * scale[:, None]
    bb_b = p["bb_b"] - shift @ p["bb_w"]

    # per-tower zero-padded head weights -> row-stacked (384, 128) for the
    # single K=384 heads contraction; matching lane-concat order cls|box|f3.
    heads_w_slot = [jnp.zeros((FEAT_C, HEAD_PAD), f32) for _ in range(3)]
    heads_b = jnp.zeros((HEAD_PAD,), f32)
    relu_mask = jnp.zeros((HEAD_PAD,), f32)
    for name, slot, _, key in _HEAD_DEFS:
        lo, hi = HEAD_SLICES[name]
        heads_w_slot[slot] = heads_w_slot[slot].at[:, lo:hi].set(p[f"{key}_w"])
        heads_b = heads_b.at[lo:hi].set(p[f"{key}_b"])
    relu_mask = relu_mask.at[_BOX2D_LO:_BOX2D_HI].set(1.0)

    w128 = jnp.concatenate(
        [bb_w,                                   # rows    0: 192
         p["temporal_w"],                        # rows  192: 320
         p["cls_tower_w1"],                      # rows  320: 448
         p["box_tower_w1"],                      # rows  448: 576
         p["f3_tower_w1"],                       # rows  576: 704
         heads_w_slot[0],                        # rows  704: 832
         heads_w_slot[1],                        # rows  832: 960
         heads_w_slot[2]],                       # rows  960:1088
        axis=0).astype(bf16)
    assert w128.shape == (W128_ROWS, FEAT_C)

    w384 = jnp.concatenate(
        [p["cls_tower_w0"], p["box_tower_w0"], p["f3_tower_w0"]],
        axis=1).astype(bf16)                     # (128, 384)

    bias = jnp.zeros((8, 3 * FEAT_C), f32)
    bias = bias.at[0, 0:FEAT_C].set(bb_b)
    bias = bias.at[1, 0:FEAT_C].set(p["temporal_b"])
    bias = bias.at[2, :].set(jnp.concatenate(
        [p["cls_tower_b0"], p["box_tower_b0"], p["f3_tower_b0"]]))
    bias = bias.at[3, 0:FEAT_C].set(p["cls_tower_b1"])
    bias = bias.at[4, 0:FEAT_C].set(p["box_tower_b1"])
    bias = bias.at[5, 0:FEAT_C].set(p["f3_tower_b1"])
    bias = bias.at[6, 0:HEAD_PAD].set(heads_b)
    bias = bias.at[7, 0:HEAD_PAD].set(relu_mask)

    return {"w128": w128, "w384": w384, "bias": bias}


# ------------------------------ location helper ------------------------------
def compute_locations_per_level(h, w, stride, offset=0.0):
    shifts_x = jnp.arange(0, w * stride, stride, dtype=jnp.float32) + offset
    shifts_y = jnp.arange(0, h * stride, stride, dtype=jnp.float32) + offset
    sy, sx = jnp.meshgrid(shifts_y, shifts_x, indexing="ij")
    return jnp.stack([sx.reshape(-1), sy.reshape(-1)], axis=1) + stride // 2


def _pick_tile(rows):
    # prefer the largest tile that still leaves >= 2 grid steps, so the
    # "parallel" grid axis can actually be sharded across v7x's 2 TensorCores.
    for cand in (2048, 1024, 512, 256, 128, 64, 32, 16):
        if rows % cand == 0 and rows // cand >= 2:
            return cand
    return rows


# --------------------------------- forward -----------------------------------
def dd3d_video_prediction4_forward(packed, images, images_t1, images_t2):
    """Inference-mode forward. images*: (B, 3, H, W) NCHW float32."""
    batch = images.shape[0]
    rows = batch * FH * FW
    assert rows % 16 == 0

    # stride-8 non-overlapping patch extraction, frame-major rows, bf16.
    # TODO(synk): at production resolutions express this stride-8 gather via a
    #             BlockSpec index_map (grid over frame/patch-row) instead of
    #             an XLA transpose; it is one extra HBM pass over the frames.
    x_all = jnp.stack([images, images_t1, images_t2], axis=0)   # (3, B, C, H, W)
    patches = (
        x_all.reshape(3, batch, IMG_C, FH, PATCH, FW, PATCH)
        .transpose(0, 1, 3, 5, 2, 4, 6)
        .reshape(3, rows, PATCH_DIM)
        .astype(jnp.bfloat16))

    tm = _pick_tile(rows)
    grid = (rows // tm,)

    fused, heads = pl.pallas_call(
        _dd3d_fused_kernel,
        out_shape=(
            jax.ShapeDtypeStruct((rows, FEAT_C), jnp.float32),
            jax.ShapeDtypeStruct((rows, HEAD_PAD), jnp.float32),
        ),
        grid=grid,
        in_specs=[
            pl.BlockSpec((3, tm, PATCH_DIM), lambda i: (0, i, 0)),      # patches
            pl.BlockSpec((W128_ROWS, FEAT_C), lambda i: (0, 0)),        # w128 slab
            pl.BlockSpec((FEAT_C, 3 * FEAT_C), lambda i: (0, 0)),       # tower0 w
            pl.BlockSpec((8, 3 * FEAT_C), lambda i: (0, 0)),            # bias+mask
        ],
        out_specs=(
            pl.BlockSpec((tm, FEAT_C), lambda i: (i, 0)),
            pl.BlockSpec((tm, HEAD_PAD), lambda i: (i, 0)),
        ),
        compiler_params=pltpu.CompilerParams(
            dimension_semantics=("parallel",),
            vmem_limit_bytes=32 * 1024 * 1024),
    )(patches, packed["w128"], packed["w384"], packed["bias"])

    locations = compute_locations_per_level(FH, FW, PATCH)      # (HW, 2)

    # one transpose of the whole lane-dense slab, then channel slices
    # (keeps the layout win instead of 9 masked sub-128 slices + transposes).
    feat_nchw = fused.reshape(batch, FH, FW, FEAT_C).transpose(0, 3, 1, 2)
    heads_nchw = heads.reshape(batch, FH, FW, HEAD_PAD).transpose(0, 3, 1, 2)

    # TODO(synk): fcos2d_inference / NMS / postprocessing are data-dependent;
    #             returning raw per-level predictions instead of Instances.
    out = {"locations": [locations], "features": [feat_nchw]}
    for name, _, _, _ in _HEAD_DEFS:
        lo, hi = HEAD_SLICES[name]
        out[name] = [heads_nchw[:, lo:hi]]
    return out


# --------------------------- pure-JAX reference -------------------------------
def reference_forward(p, images, images_t1, images_t2):
    batch = images.shape[0]

    def prep(x):
        return (x - p["pixel_mean"][None, :, None, None]) / p["pixel_std"][None, :, None, None]

    def patchify(x):
        return (x.reshape(batch, IMG_C, FH, PATCH, FW, PATCH)
                .transpose(0, 2, 4, 1, 3, 5)
                .reshape(batch * FH * FW, PATCH_DIM))

    def dense(x, w, b, relu=False):
        y = x @ w + b
        return jnp.maximum(y, 0.0) if relu else y

    feats = [dense(patchify(prep(x)), p["bb_w"], p["bb_b"], True)
             for x in (images, images_t1, images_t2)]
    prev_mean = (feats[1] + feats[2]) * 0.5
    fused = feats[0] + dense(prev_mean, p["temporal_w"], p["temporal_b"])

    cls_t = dense(dense(fused, p["cls_tower_w0"], p["cls_tower_b0"], True),
                  p["cls_tower_w1"], p["cls_tower_b1"], True)
    box_t = dense(dense(fused, p["box_tower_w0"], p["box_tower_b0"], True),
                  p["box_tower_w1"], p["box_tower_b1"], True)
    f3_t = dense(dense(fused, p["f3_tower_w0"], p["f3_tower_b0"], True),
                 p["f3_tower_w1"], p["f3_tower_b1"], True)
    towers = (cls_t, box_t, f3_t)

    out = {"features": fused}
    for name, slot, _, key in _HEAD_DEFS:
        relu = name == "box2d_reg"
        out[name] = dense(towers[slot], p[f"{key}_w"], p[f"{key}_b"], relu)
    return out


# ----------------------------------- main -------------------------------------
if __name__ == "__main__":
    key = jax.random.PRNGKey(0)
    k0, k1, k2 = jax.random.split(key, 3)
    images = jax.random.uniform(k0, (B, IMG_C, IMG_H, IMG_W), jnp.float32) * 255.0
    images_t1 = jax.random.uniform(k1, (B, IMG_C, IMG_H, IMG_W), jnp.float32) * 255.0
    images_t2 = jax.random.uniform(k2, (B, IMG_C, IMG_H, IMG_W), jnp.float32) * 255.0

    raw = init_params(seed=0)
    packed = pack_params(raw)

    fwd = jax.jit(dd3d_video_prediction4_forward)
    out = fwd(packed, images, images_t1, images_t2)
    out = jax.tree_util.tree_map(jax.block_until_ready, out)

    # sanity: shapes and finiteness
    assert out["logits"][0].shape == (B, NUM_CLASSES, FH, FW)
    assert out["box2d_reg"][0].shape == (B, 4, FH, FW)
    assert out["centerness"][0].shape == (B, 1, FH, FW)
    assert out["box3d_quat"][0].shape == (B, 4, FH, FW)
    assert out["box3d_depth"][0].shape == (B, 1, FH, FW)
    assert out["dense_depth"][0].shape == (B, 1, FH, FW)
    assert out["features"][0].shape == (B, FEAT_C, FH, FW)
    assert out["locations"][0].shape == (FH * FW, 2)
    for leaf in jax.tree_util.tree_leaves(out):
        assert bool(jnp.all(jnp.isfinite(leaf)))

    # pure-JAX f32 reference check (un-fused, un-folded weights).  Kernel runs
    # its matmuls with bf16 operands (f32 accumulation), so allow 3e-2.
    ref = reference_forward(raw, images, images_t1, images_t2)

    def to_rows(x_nchw):
        return x_nchw.transpose(0, 2, 3, 1).reshape(B * FH * FW, -1)

    for name in list(HEAD_SLICES.keys()) + ["features"]:
        got = to_rows(out[name][0])
        want = ref[name]
        max_diff = float(jnp.max(jnp.abs(got - want)))
        assert max_diff < 3e-2, (name, max_diff)

    print("KERNEL_OK")
</pallas_src>

<mosaic_0001>
module attributes {stable_mosaic.version = 11 : i64} {
  func.func @_dd3d_fused_kernel(%arg0: i32, %arg1: memref<3x16x192xbf16, #tpu.memory_space<vmem>>, %arg2: memref<1088x128xbf16, #tpu.memory_space<vmem>>, %arg3: memref<128x384xbf16, #tpu.memory_space<vmem>>, %arg4: memref<8x384xf32, #tpu.memory_space<vmem>>, %arg5: memref<16x128xf32, #tpu.memory_space<vmem>>, %arg6: memref<16x128xf32, #tpu.memory_space<vmem>>) attributes {dimension_semantics = [#tpu.dimension_semantics<parallel>], iteration_bounds = array<i64: 2>, scalar_prefetch = 0 : i64, scratch_operands = 0 : i64, tpu.core_type = #tpu.core_type<tc>, window_params = [{transform_indices = @transform_0, window_bounds = array<i64: 3, 16, 192>}, {pipeline_mode = #tpu.pipeline_mode<synchronous>, transform_indices = @transform_1, window_bounds = array<i64: 1088, 128>}, {pipeline_mode = #tpu.pipeline_mode<synchronous>, transform_indices = @transform_2, window_bounds = array<i64: 128, 384>}, {pipeline_mode = #tpu.pipeline_mode<synchronous>, transform_indices = @transform_3, window_bounds = array<i64: 8, 384>}, {transform_indices = @transform_4, window_bounds = array<i64: 16, 128>}, {transform_indices = @transform_5, window_bounds = array<i64: 16, 128>}]} {
    %c0 = arith.constant 0 : index
    %c0_0 = arith.constant 0 : index
    %0 = vector.load %arg4[%c0, %c0_0] : memref<8x384xf32, #tpu.memory_space<vmem>>, vector<8x384xf32>
    %1 = vector.extract_strided_slice %0 {offsets = [0, 0], sizes = [1, 128], strides = [1, 1]} : vector<8x384xf32> to vector<1x128xf32>
    %2 = vector.extract_strided_slice %0 {offsets = [1, 0], sizes = [1, 128], strides = [1, 1]} : vector<8x384xf32> to vector<1x128xf32>
    %3 = vector.extract_strided_slice %0 {offsets = [2, 0], sizes = [1, 384], strides = [1, 1]} : vector<8x384xf32> to vector<1x384xf32>
    %4 = vector.extract_strided_slice %0 {offsets = [3, 0], sizes = [1, 128], strides = [1, 1]} : vector<8x384xf32> to vector<1x128xf32>
    %5 = vector.extract_strided_slice %0 {offsets = [4, 0], sizes = [1, 128], strides = [1, 1]} : vector<8x384xf32> to vector<1x128xf32>
    %6 = vector.extract_strided_slice %0 {offsets = [5, 0], sizes = [1, 128], strides = [1, 1]} : vector<8x384xf32> to vector<1x128xf32>
    %7 = vector.extract_strided_slice %0 {offsets = [6, 0], sizes = [1, 128], strides = [1, 1]} : vector<8x384xf32> to vector<1x128xf32>
    %8 = vector.extract_strided_slice %0 {offsets = [7, 0], sizes = [1, 128], strides = [1, 1]} : vector<8x384xf32> to vector<1x128xf32>
    %cst = arith.constant 5.000000e-01 : f32
    %9 = vector.broadcast %cst : f32 to vector<1x128xf32>
    %10 = arith.cmpf ogt, %8, %9 : vector<1x128xf32>
    %c0_1 = arith.constant 0 : index
    %c0_2 = arith.constant 0 : index
    %c0_3 = arith.constant 0 : index
    %11 = vector.load %arg1[%c0_1, %c0_2, %c0_3] : memref<3x16x192xbf16, #tpu.memory_space<vmem>>, vector<3x16x192xbf16>
    %12 = vector.shape_cast %11 : vector<3x16x192xbf16> to vector<48x192xbf16>
    %c0_4 = arith.constant 0 : index
    %c0_5 = arith.constant 0 : index
    %13 = vector.load %arg2[%c0_4, %c0_5] : memref<1088x128xbf16, #tpu.memory_space<vmem>>, vector<192x128xbf16>
    %cst_6 = arith.constant dense<0.000000e+00> : vector<48x128xf32>
    %14 = tpu.matmul %12, %13, %cst_6 {dimension_numbers = #tpu.dot_dimension_numbers<[1], [0], [0], [1], [0, 0, 1, 1], [], []>} : vector<48x192xbf16>, vector<192x128xbf16>, vector<48x128xf32> -> vector<48x128xf32>
    %15 = vector.broadcast %1 : vector<1x128xf32> to vector<48x128xf32>
    %16 = arith.addf %14, %15 : vector<48x128xf32>
    %cst_7 = arith.constant 0.000000e+00 : f32
    %17 = vector.broadcast %cst_7 : f32 to vector<48x128xf32>
    %18 = arith.maximumf %16, %17 : vector<48x128xf32>
    %19 = vector.extract_strided_slice %18 {offsets = [0, 0], sizes = [16, 128], strides = [1, 1]} : vector<48x128xf32> to vector<16x128xf32>
    %20 = vector.extract_strided_slice %18 {offsets = [16, 0], sizes = [16, 128], strides = [1, 1]} : vector<48x128xf32> to vector<16x128xf32>
    %21 = vector.extract_strided_slice %18 {offsets = [32, 0], sizes = [16, 128], strides = [1, 1]} : vector<48x128xf32> to vector<16x128xf32>
    %22 = arith.addf %20, %21 : vector<16x128xf32>
    %cst_8 = arith.constant 5.000000e-01 : f32
    %23 = vector.broadcast %cst_8 : f32 to vector<16x128xf32>
    %24 = arith.mulf %22, %23 : vector<16x128xf32>
    %25 = arith.truncf %24 : vector<16x128xf32> to vector<16x128xbf16>
    %c192 = arith.constant 192 : index
    %c0_9 = arith.constant 0 : index
    %26 = vector.load %arg2[%c192, %c0_9] : memref<1088x128xbf16, #tpu.memory_space<vmem>>, vector<128x128xbf16>
    %cst_10 = arith.constant dense<0.000000e+00> : vector<16x128xf32>
    %27 = tpu.matmul %25, %26, %cst_10 {dimension_numbers = #tpu.dot_dimension_numbers<[1], [0], [0], [1], [0, 0, 1, 1], [], []>} : vector<16x128xbf16>, vector<128x128xbf16>, vector<16x128xf32> -> vector<16x128xf32>
    %28 = vector.broadcast %2 : vector<1x128xf32> to vector<16x128xf32>
    %29 = arith.addf %27, %28 : vector<16x128xf32>
    %30 = arith.addf %19, %29 : vector<16x128xf32>
    %c0_11 = arith.constant 0 : index
    %c0_12 = arith.constant 0 : index
    %31 = vector.load %arg5[%c0_11, %c0_12] : memref<16x128xf32, #tpu.memory_space<vmem>>, vector<16x128xf32>
    tpu.vector_store %arg5[%c0_11, %c0_12], %30 {strides = array<i32>} : memref<16x128xf32, #tpu.memory_space<vmem>>, vector<16x128xf32>,
    %32 = arith.truncf %30 : vector<16x128xf32> to vector<16x128xbf16>
    %c0_13 = arith.constant 0 : index
    %c0_14 = arith.constant 0 : index
    %33 = vector.load %arg3[%c0_13, %c0_14] : memref<128x384xbf16, #tpu.memory_space<vmem>>, vector<128x384xbf16>
    %cst_15 = arith.constant dense<0.000000e+00> : vector<16x384xf32>
    %34 = tpu.matmul %32, %33, %cst_15 {dimension_numbers = #tpu.dot_dimension_numbers<[1], [0], [0], [1], [0, 0, 1, 1], [], []>} : vector<16x128xbf16>, vector<128x384xbf16>, vector<16x384xf32> -> vector<16x384xf32>
    %35 = vector.broadcast %3 : vector<1x384xf32> to vector<16x384xf32>
    %36 = arith.addf %34, %35 : vector<16x384xf32>
    %cst_16 = arith.constant 0.000000e+00 : f32
    %37 = vector.broadcast %cst_16 : f32 to vector<16x384xf32>
    %38 = arith.maximumf %36, %37 : vector<16x384xf32>
    %39 = arith.truncf %38 : vector<16x384xf32> to vector<16x384xbf16>
    %c320 = arith.constant 320 : index
    %c0_17 = arith.constant 0 : index
    %40 = vector.load %arg2[%c320, %c0_17] : memref<1088x128xbf16, #tpu.memory_space<vmem>>, vector<128x128xbf16>
    %41 = vector.extract_strided_slice %39 {offsets = [0, 0], sizes = [16, 128], strides = [1, 1]} : vector<16x384xbf16> to vector<16x128xbf16>
    %cst_18 = arith.constant dense<0.000000e+00> : vector<16x128xf32>
    %42 = tpu.matmul %41, %40, %cst_18 {dimension_numbers = #tpu.dot_dimension_numbers<[1], [0], [0], [1], [0, 0, 1, 1], [], []>} : vector<16x128xbf16>, vector<128x128xbf16>, vector<16x128xf32> -> vector<16x128xf32>
    %43 = vector.broadcast %4 : vector<1x128xf32> to vector<16x128xf32>
    %44 = arith.addf %42, %43 : vector<16x128xf32>
    %cst_19 = arith.constant 0.000000e+00 : f32
    %45 = vector.broadcast %cst_19 : f32 to vector<16x128xf32>
    %46 = arith.maximumf %44, %45 : vector<16x128xf32>
    %47 = arith.truncf %46 : vector<16x128xf32> to vector<16x128xbf16>
    %c448 = arith.constant 448 : index
    %c0_20 = arith.constant 0 : index
    %48 = vector.load %arg2[%c448, %c0_20] : memref<1088x128xbf16, #tpu.memory_space<vmem>>, vector<128x128xbf16>
    %49 = vector.extract_strided_slice %39 {offsets = [0, 128], sizes = [16, 128], strides = [1, 1]} : vector<16x384xbf16> to vector<16x128xbf16>
    %cst_21 = arith.constant dense<0.000000e+00> : vector<16x128xf32>
    %50 = tpu.matmul %49, %48, %cst_21 {dimension_numbers = #tpu.dot_dimension_numbers<[1], [0], [0], [1], [0, 0, 1, 1], [], []>} : vector<16x128xbf16>, vector<128x128xbf16>, vector<16x128xf32> -> vector<16x128xf32>
    %51 = vector.broadcast %5 : vector<1x128xf32> to vector<16x128xf32>
    %52 = arith.addf %50, %51 : vector<16x128xf32>
    %cst_22 = arith.constant 0.000000e+00 : f32
    %53 = vector.broadcast %cst_22 : f32 to vector<16x128xf32>
    %54 = arith.maximumf %52, %53 : vector<16x128xf32>
    %55 = arith.truncf %54 : vector<16x128xf32> to vector<16x128xbf16>
    %c576 = arith.constant 576 : index
    %c0_23 = arith.constant 0 : index
    %56 = vector.load %arg2[%c576, %c0_23] : memref<1088x128xbf16, #tpu.memory_space<vmem>>, vector<128x128xbf16>
    %57 = vector.extract_strided_slice %39 {offsets = [0, 256], sizes = [16, 128], strides = [1, 1]} : vector<16x384xbf16> to vector<16x128xbf16>
    %cst_24 = arith.constant dense<0.000000e+00> : vector<16x128xf32>
    %58 = tpu.matmul %57, %56, %cst_24 {dimension_numbers = #tpu.dot_dimension_numbers<[1], [0], [0], [1], [0, 0, 1, 1], [], []>} : vector<16x128xbf16>, vector<128x128xbf16>, vector<16x128xf32> -> vector<16x128xf32>
    %59 = vector.broadcast %6 : vector<1x128xf32> to vector<16x128xf32>
    %60 = arith.addf %58, %59 : vector<16x128xf32>
    %cst_25 = arith.constant 0.000000e+00 : f32
    %61 = vector.broadcast %cst_25 : f32 to vector<16x128xf32>
    %62 = arith.maximumf %60, %61 : vector<16x128xf32>
    %63 = arith.truncf %62 : vector<16x128xf32> to vector<16x128xbf16>
    %64 = tpu.concatenate %47, %55, %63 in 1 : vector<16x128xbf16>, vector<16x128xbf16>, vector<16x128xbf16> -> vector<16x384xbf16>
    %c704 = arith.constant 704 : index
    %c0_26 = arith.constant 0 : index
    %65 = vector.load %arg2[%c704, %c0_26] : memref<1088x128xbf16, #tpu.memory_space<vmem>>, vector<384x128xbf16>
    %cst_27 = arith.constant dense<0.000000e+00> : vector<16x128xf32>
    %66 = tpu.matmul %64, %65, %cst_27 {dimension_numbers = #tpu.dot_dimension_numbers<[1], [0], [0], [1], [0, 0, 1, 1], [], []>} : vector<16x384xbf16>, vector<384x128xbf16>, vector<16x128xf32> -> vector<16x128xf32>
    %67 = vector.broadcast %7 : vector<1x128xf32> to vector<16x128xf32>
    %68 = arith.addf %66, %67 : vector<16x128xf32>
    %cst_28 = arith.constant 0.000000e+00 : f32
    %69 = vector.broadcast %cst_28 : f32 to vector<16x128xf32>
    %70 = arith.maximumf %68, %69 : vector<16x128xf32>
    %71 = vector.shape_cast %10 : vector<1x128xi1> to vector<1x128xi1>
    %72 = vector.broadcast %71 : vector<1x128xi1> to vector<16x128xi1>
    %73 = arith.select %72, %70, %68 : vector<16x128xi1>, vector<16x128xf32>
    %c0_29 = arith.constant 0 : index
    %c0_30 = arith.constant 0 : index
    %74 = vector.load %arg6[%c0_29, %c0_30] : memref<16x128xf32, #tpu.memory_space<vmem>>, vector<16x128xf32>
    tpu.vector_store %arg6[%c0_29, %c0_30], %73 {strides = array<i32>} : memref<16x128xf32, #tpu.memory_space<vmem>>, vector<16x128xf32>,
    return
  }
  func.func @transform_0(%arg0: i32) -> (i32, i32, i32) {
    %c0_i32 = arith.constant 0 : i32
    %c0_i32_0 = arith.constant 0 : i32
    %c0_i32_1 = arith.constant 0 : i32
    return %c0_i32, %arg0, %c0_i32_0 : i32, i32, i32
  }
  func.func @transform_1(%arg0: i32) -> (i32, i32) {
    %c0_i32 = arith.constant 0 : i32
    %c0_i32_0 = arith.constant 0 : i32
    %c0_i32_1 = arith.constant 0 : i32
    return %c0_i32, %c0_i32_0 : i32, i32
  }
  func.func @transform_2(%arg0: i32) -> (i32, i32) {
    %c0_i32 = arith.constant 0 : i32
    %c0_i32_0 = arith.constant 0 : i32
    %c0_i32_1 = arith.constant 0 : i32
    return %c0_i32, %c0_i32_0 : i32, i32
  }
  func.func @transform_3(%arg0: i32) -> (i32, i32) {
    %c0_i32 = arith.constant 0 : i32
    %c0_i32_0 = arith.constant 0 : i32
    %c0_i32_1 = arith.constant 0 : i32
    return %c0_i32, %c0_i32_0 : i32, i32
  }
  func.func @transform_4(%arg0: i32) -> (i32, i32) {
    %c0_i32 = arith.constant 0 : i32
    %c0_i32_0 = arith.constant 0 : i32
    return %arg0, %c0_i32 : i32, i32
  }
  func.func @transform_5(%arg0: i32) -> (i32, i32) {
    %c0_i32 = arith.constant 0 : i32
    %c0_i32_0 = arith.constant 0 : i32
    return %arg0, %c0_i32 : i32, i32
  }
}

</mosaic_0001>

<llo_original>
// kernel: dd3d_video_prediction4_forward.1
$region0: #{dd3d_video_prediction4_forward.1}
  #allocation0 [shape = 'u32[]', space=smem, size = 0x4, offset = 0x4, fixed_abs, tag = 'smem constant byte address 0x4 - core index']
  #allocation1 [shape = 'u32[144,128]{1,0:T(1,128)}', space=vmem, size = 0x12000, scoped, tag = 'internal scratch']
  %s0 = inlined_call_operand.vmem [shape: bf16[3,32,192], index: 0, kind: input, shape index: {}]
  %s1 = inlined_call_operand.vmem [shape: bf16[1088,128], index: 1, kind: input, shape index: {}]
  %s2 = inlined_call_operand.vmem [shape: bf16[128,384], index: 2, kind: input, shape index: {}]
  %s3 = inlined_call_operand.vmem [shape: f32[8,384], index: 3, kind: input, shape index: {}]
  %s4 = inlined_call_operand.hbm [shape: f32[32,128], index: 4, kind: output, shape index: {0}]
  %s5 = inlined_call_operand.vmem [shape: f32[32,128], index: 5, kind: output, shape index: {1}]
  %6 = xla_tuple %s4, %s5
  %s7 = sld [smem:[#allocation0]]
  $region95: #{dd3d_video_prediction4_forward.1} parent=0
    _
  %s9 = ssub.s32 1, %s7
  %s10 = scalar_select 0, %s9, %s7
  $region1: #{dd3d_video_prediction4_forward.1} parent=0
    #allocation2 [shape = 'u8[49152]{0}', space=vmem, size = 0xc000, scoped, tag = 'input window, operand 0']
    #allocation3 [shape = 'u8[16384]{0}', space=vmem, size = 0x4000, scoped, tag = 'output window, operand 0']
    #allocation4 [shape = 's32[2]{0}', space=sflag, size = 0x8, scoped, tag = 'scoped memory for dd3d_video_prediction4_forward.1']
    %11 = vsyncpa [#allocation4], 0
    %s12 = scalar_lea.sflag [#allocation4], 1
    %13 = vsyncpa %s12, 0
    loop: start=0, step=1, limit=4
    $region2: #{dd3d_video_prediction4_forward.1} parent=1 // loop_pre_header
      _
    $region3: #{dd3d_video_prediction4_forward.1} parent=1 // loop_header
      %s15 = sphi 0, %s19
      %p16 = scmp.ge.s32.totalorder %s15, 4
      %s25 = sphi 0, %s27
      %s28 = sphi 0, %s25
      %s29 = sphi 0, %s28
      %s45 = sphi 0, %s29
      %s49 = sphi 0, %s49
      %s51 = sphi 0, %s49
      %s52 = sphi 0, %s51
      %s66 = sphi 0, %s52
      %s70 = sphi 0, %s70
      %s72 = sphi 0, %s70
      %s73 = sphi 0, %s72
      %s87 = sphi 0, %s73
      %s91 = sphi 0, %s91
      %s93 = sphi 0, %s91
      %s94 = sphi 0, %s93
      %s108 = sphi 0, %s94
      %s114 = sphi 0, %s116
      %s117 = sphi 0, %s114
      %s118 = sphi 0, %s117
      %s134 = sphi 0, %s118
      %s140 = sphi 0, %s142
      %s143 = sphi 0, %s140
      %s144 = sphi 0, %s143
      %s160 = sphi 0, %s144
    $region4: #{dd3d_video_prediction4_forward.1} parent=1 // loop_header_branch
      %18 = sbr.rel (%p16) target = $region8
    $region5: #{dd3d_video_prediction4_forward.1} parent=1 // loop_body
      %s20 = ssub.s32 %s15, 1
      %s21 = ssub.s32 %s15, 2
      %s22 = sadd.s32 %s15, 1
      %s23 = ssub.s32 %s15, %s22
      %p24 = scmp.eq.s32.totalorder %s23, 0
      %s26 = sadd.s32 %s25, 1
      %s27 = scalar_select %p24, %s25, %s26
      %p30 = pneg %p24
      %p31 = scmp.eq.s32.totalorder %s15, 1
      %p32 = por %p30, %p31
      %p33 = scmp.ne.s32.totalorder %s25, %s28
      %p34 = scmp.eq.s32.totalorder %s15, 0
      %p35 = por %p33, %p34
      %p36 = scmp.ne.s32.totalorder %s25, %s28
      %p37 = scmp.eq.s32.totalorder %s20, 1
      %p38 = por %p36, %p37
      %p39 = scmp.ne.s32.totalorder %s28, %s29
      %p40 = scmp.eq.s32.totalorder %s20, 0
      %p41 = por %p39, %p40
      %p42 = scmp.ne.s32.totalorder %s28, %s29
      %p43 = scmp.eq.s32.totalorder %s21, 1
      %p44 = por %p42, %p43
      %p46 = scmp.ne.s32.totalorder %s29, %s45
      %p47 = scmp.eq.s32.totalorder %s21, 0
      %p48 = por %p46, %p47
      %s50 = sadd.s32 %s49, 1
      %p53 = scmp.eq.s32.totalorder %s15, 1
      %p54 = scmp.ne.s32.totalorder %s49, %s51
      %p55 = scmp.eq.s32.totalorder %s15, 0
      %p56 = por %p54, %p55
      %p57 = scmp.ne.s32.totalorder %s49, %s51
      %p58 = scmp.eq.s32.totalorder %s20, 1
      %p59 = por %p57, %p58
      %p60 = scmp.ne.s32.totalorder %s51, %s52
      %p61 = scmp.eq.s32.totalorder %s20, 0
      %p62 = por %p60, %p61
      %p63 = scmp.ne.s32.totalorder %s51, %s52
      %p64 = scmp.eq.s32.totalorder %s21, 1
      %p65 = por %p63, %p64
      %p67 = scmp.ne.s32.totalorder %s52, %s66
      %p68 = scmp.eq.s32.totalorder %s21, 0
      %p69 = por %p67, %p68
      %s71 = sadd.s32 %s70, 1
      %p74 = scmp.eq.s32.totalorder %s15, 1
      %p75 = scmp.ne.s32.totalorder %s70, %s72
      %p76 = scmp.eq.s32.totalorder %s15, 0
      %p77 = por %p75, %p76
      %p78 = scmp.ne.s32.totalorder %s70, %s72
      %p79 = scmp.eq.s32.totalorder %s20, 1
      %p80 = por %p78, %p79
      %p81 = scmp.ne.s32.totalorder %s72, %s73
      %p82 = scmp.eq.s32.totalorder %s20, 0
      %p83 = por %p81, %p82
      %p84 = scmp.ne.s32.totalorder %s72, %s73
      %p85 = scmp.eq.s32.totalorder %s21, 1
      %p86 = por %p84, %p85
      %p88 = scmp.ne.s32.totalorder %s73, %s87
      %p89 = scmp.eq.s32.totalorder %s21, 0
      %p90 = por %p88, %p89
      %s92 = sadd.s32 %s91, 1
      %p95 = scmp.eq.s32.totalorder %s15, 1
      %p96 = scmp.ne.s32.totalorder %s91, %s93
      %p97 = scmp.eq.s32.totalorder %s15, 0
      %p98 = por %p96, %p97
      %p99 = scmp.ne.s32.totalorder %s91, %s93
      %p100 = scmp.eq.s32.totalorder %s20, 1
      %p101 = por %p99, %p100
      %p102 = scmp.ne.s32.totalorder %s93, %s94
      %p103 = scmp.eq.s32.totalorder %s20, 0
      %p104 = por %p102, %p103
      %p105 = scmp.ne.s32.totalorder %s93, %s94
      %p106 = scmp.eq.s32.totalorder %s21, 1
      %p107 = por %p105, %p106
      %p109 = scmp.ne.s32.totalorder %s94, %s108
      %p110 = scmp.eq.s32.totalorder %s21, 0
      %p111 = por %p109, %p110
      %s112 = ssub.s32 %s15, %s22
      %p113 = scmp.eq.s32.totalorder %s112, 0
      %s115 = sadd.s32 %s114, 1
      %s116 = scalar_select %p113, %s114, %s115
      %p119 = pneg %p113
      %p120 = scmp.eq.s32.totalorder %s15, 1
      %p121 = por %p119, %p120
      %p122 = scmp.ne.s32.totalorder %s114, %s117
      %p123 = scmp.eq.s32.totalorder %s15, 0
      %p124 = por %p122, %p123
      %p125 = scmp.ne.s32.totalorder %s114, %s117
      %p126 = scmp.eq.s32.totalorder %s20, 1
      %p127 = por %p125, %p126
      %p128 = scmp.ne.s32.totalorder %s117, %s118
      %p129 = scmp.eq.s32.totalorder %s20, 0
      %p130 = por %p128, %p129
      %p131 = scmp.ne.s32.totalorder %s117, %s118
      %p132 = scmp.eq.s32.totalorder %s21, 1
      %p133 = por %p131, %p132
      %p135 = scmp.ne.s32.totalorder %s118, %s134
      %p136 = scmp.eq.s32.totalorder %s21, 0
      %p137 = por %p135, %p136
      %s138 = ssub.s32 %s15, %s22
      %p139 = scmp.eq.s32.totalorder %s138, 0
      %s141 = sadd.s32 %s140, 1
      %s142 = scalar_select %p139, %s140, %s141
      %p145 = pneg %p139
      %p146 = scmp.eq.s32.totalorder %s15, 1
      %p147 = por %p145, %p146
      %p148 = scmp.ne.s32.totalorder %s140, %s143
      %p149 = scmp.eq.s32.totalorder %s15, 0
      %p150 = por %p148, %p149
      %p151 = scmp.ne.s32.totalorder %s140, %s143
      %p152 = scmp.eq.s32.totalorder %s20, 1
      %p153 = por %p151, %p152
      %p154 = scmp.ne.s32.totalorder %s143, %s144
      %p155 = scmp.eq.s32.totalorder %s20, 0
      %p156 = por %p154, %p155
      %p157 = scmp.ne.s32.totalorder %s143, %s144
      %p158 = scmp.eq.s32.totalorder %s21, 1
      %p159 = por %p157, %p158
      %p161 = scmp.ne.s32.totalorder %s144, %s160
      %p162 = scmp.eq.s32.totalorder %s21, 0
      %p163 = por %p161, %p162
      %p164 = scmp.le.s32.totalorder 1, %s15
      %p165 = scmp.lt.s32.totalorder %s15, 3
      %p166 = pnand %p164, %p165
      %p167 = pneg %p166
      // Predicated region
      $region9: #{dd3d_video_prediction4_forward.1} parent=5 // pred_check
        _
      $region10: #{dd3d_video_prediction4_forward.1} parent=5 // pred_check_branch
        %169 = sbr.rel (%p166) target = $region12
      $region11: #{dd3d_video_prediction4_forward.1} parent=5 // pred_region
        %s170 = ssub.s32 %s15, 1
        // Predicated region
        $region13: #{dd3d_video_prediction4_forward.1} parent=11 // pred_check
          %p171 = pneg %p62
        $region14: #{dd3d_video_prediction4_forward.1} parent=11 // pred_check_branch
          %173 = sbr.rel (%p171) target = $region16
        $region15: #{dd3d_video_prediction4_forward.1} parent=11 // pred_region
          _
        $region16: #{dd3d_video_prediction4_forward.1} parent=11 // pred_fallthru
          _
        // Predicated region
        $region17: #{dd3d_video_prediction4_forward.1} parent=11 // pred_check
          %p174 = pneg %p83
        $region18: #{dd3d_video_prediction4_forward.1} parent=11 // pred_check_branch
          %176 = sbr.rel (%p174) target = $region20
        $region19: #{dd3d_video_prediction4_forward.1} parent=11 // pred_region
          _
        $region20: #{dd3d_video_prediction4_forward.1} parent=11 // pred_fallthru
          _
        // Predicated region
        $region21: #{dd3d_video_prediction4_forward.1} parent=11 // pred_check
          %p177 = pneg %p104
        $region22: #{dd3d_video_prediction4_forward.1} parent=11 // pred_check_branch
          %179 = sbr.rel (%p177) target = $region24
        $region23: #{dd3d_video_prediction4_forward.1} parent=11 // pred_region
          _
        $region24: #{dd3d_video_prediction4_forward.1} parent=11 // pred_fallthru
          _
      $region12: #{dd3d_video_prediction4_forward.1} parent=5 // pred_fallthru
        _
      %p180 = scmp.lt.s32.totalorder %s15, 2
      // Predicated region
      $region25: #{dd3d_video_prediction4_forward.1} parent=5 // pred_check
        %p181 = pneg %p180
      $region26: #{dd3d_video_prediction4_forward.1} parent=5 // pred_check_branch
        %183 = sbr.rel (%p181) target = $region28
      $region27: #{dd3d_video_prediction4_forward.1} parent=5 // pred_region
        // Predicated region
        $region29: #{dd3d_video_prediction4_forward.1} parent=27 // pred_check
          %p184 = pneg %p35
        $region30: #{dd3d_video_prediction4_forward.1} parent=27 // pred_check_branch
          %186 = sbr.rel (%p184) target = $region32
        $region31: #{dd3d_video_prediction4_forward.1} parent=27 // pred_region
          %s187 = sand.u32 %s25, 1
          %s188 = sand.u32 %s25, 1
          %s189 = smul.addr %s188, 48
          %s190 = scalar_lea.vmem [#allocation2], %s189
          %s191 = smul.u32 2, %s15
          %s192 = smul.addr %s191, 2
          %s193 = smul.addr %s192, 4
          %s194 = scalar_lea.vmem %s0, %s193
          // Predicated region
          $region33: #{dd3d_video_prediction4_forward.1} parent=31 // pred_check
            _
          $region34: #{dd3d_video_prediction4_forward.1} parent=31 // pred_check_branch
            %196 = sbr.rel (0) target = $region36
          $region35: #{dd3d_video_prediction4_forward.1} parent=31 // pred_region
            // Predicated region
            $region37: #{dd3d_video_prediction4_forward.1} parent=35 // pred_check
              _
            $region38: #{dd3d_video_prediction4_forward.1} parent=35 // pred_check_branch
              %198 = sbr.rel (0) target = $region40
            $region39: #{dd3d_video_prediction4_forward.1} parent=35 // pred_region
              // Predicated region
              $region52: #{dd3d_video_prediction4_forward.1} parent=39 // pred_check
                _
              $region53: #{dd3d_video_prediction4_forward.1} parent=39 // pred_check_branch
                %224 = sbr.rel (0) target = $region55
              $region54: #{dd3d_video_prediction4_forward.1} parent=39 // pred_region
                loop: start=0, step=1, limit=1
                $region56: #{dd3d_video_prediction4_forward.1} parent=54 // loop_pre_header
                  _
                $region57: #{dd3d_video_prediction4_forward.1} parent=54 // loop_header
                  %s226 = sphi 0, %s230
                  %p227 = scmp.ge.s32.totalorder %s226, 1
                  %s231 = sphi %s194, %s194
                  %s232 = sphi %s190, %s190
                $region58: #{dd3d_video_prediction4_forward.1} parent=54 // loop_header_branch
                  %229 = sbr.rel (%p227) target = $region62
                $region59: #{dd3d_video_prediction4_forward.1} parent=54 // loop_body
                  %v233 = vld [vmem:[%s231] sm:$0xff]
                  %234 = vst [vmem:[%s232] sm:$0xff] %v233
                  %v235 = vld [vmem:[%s231 + $0x8] sm:$0xff]
                  %236 = vst [vmem:[%s232 + $0x8] sm:$0xff] %v235
                  %v237 = vld [vmem:[%s231 + $0x20] sm:$0xff]
                  %238 = vst [vmem:[%s232 + $0x10] sm:$0xff] %v237
                  %v239 = vld [vmem:[%s231 + $0x28] sm:$0xff]
                  %240 = vst [vmem:[%s232 + $0x18] sm:$0xff] %v239
                  %v241 = vld [vmem:[%s231 + $0x40] sm:$0xff]
                  %242 = vst [vmem:[%s232 + $0x20] sm:$0xff] %v241
                  %v243 = vld [vmem:[%s231 + $0x48] sm:$0xff]
                  %244 = vst [vmem:[%s232 + $0x28] sm:$0xff] %v243
                $region60: #{dd3d_video_prediction4_forward.1} parent=54 // loop_footer
                  %s230 = sadd.s32 1, %s226
                $region61: #{dd3d_video_prediction4_forward.1} parent=54 // loop_footer_branch
                  %225 = sbr.rel target = $region57
                $region62: #{dd3d_video_prediction4_forward.1} parent=54 // loop_exit
                  _
              $region55: #{dd3d_video_prediction4_forward.1} parent=39 // pred_fallthru
                _
              // Predicated region
              $region63: #{dd3d_video_prediction4_forward.1} parent=39 // pred_check
                _
              $region64: #{dd3d_video_prediction4_forward.1} parent=39 // pred_check_branch
                %246 = sbr.rel target = $region66
              $region65: #{dd3d_video_prediction4_forward.1} parent=39 // pred_region
                _
              $region66: #{dd3d_video_prediction4_forward.1} parent=39 // pred_fallthru
                _
            $region40: #{dd3d_video_prediction4_forward.1} parent=35 // pred_fallthru
              _
            // Predicated region
            $region41: #{dd3d_video_prediction4_forward.1} parent=35 // pred_check
              _
            $region42: #{dd3d_video_prediction4_forward.1} parent=35 // pred_check_branch
              %200 = sbr.rel target = $region44
            $region43: #{dd3d_video_prediction4_forward.1} parent=35 // pred_region
              %s202 = ssub.s32 256, 1
              loop: start=0, step=1, limit=1
              $region45: #{dd3d_video_prediction4_forward.1} parent=43 // loop_pre_header
                _
              $region46: #{dd3d_video_prediction4_forward.1} parent=43 // loop_header
                %s204 = sphi 0, %s208
                %p205 = scmp.ge.s32.totalorder %s204, 1
                %s209 = sphi %s194, %s194
                %s210 = sphi %s190, %s190
              $region47: #{dd3d_video_prediction4_forward.1} parent=43 // loop_header_branch
                %207 = sbr.rel (%p205) target = $region51
              $region48: #{dd3d_video_prediction4_forward.1} parent=43 // loop_body
                %v211 = vld [vmem:[%s209] sm:%s202]
                %212 = vst [vmem:[%s210] sm:%s202] %v211
                %v213 = vld [vmem:[%s209 + $0x8] sm:%s202]
                %214 = vst [vmem:[%s210 + $0x8] sm:%s202] %v213
                %v215 = vld [vmem:[%s209 + $0x20] sm:%s202]
                %216 = vst [vmem:[%s210 + $0x10] sm:%s202] %v215
                %v217 = vld [vmem:[%s209 + $0x28] sm:%s202]
                %218 = vst [vmem:[%s210 + $0x18] sm:%s202] %v217
                %v219 = vld [vmem:[%s209 + $0x40] sm:%s202]
                %220 = vst [vmem:[%s210 + $0x20] sm:%s202] %v219
                %v221 = vld [vmem:[%s209 + $0x48] sm:%s202]
                %222 = vst [vmem:[%s210 + $0x28] sm:%s202] %v221
              $region49: #{dd3d_video_prediction4_forward.1} parent=43 // loop_footer
                %s208 = sadd.s32 1, %s204
              $region50: #{dd3d_video_prediction4_forward.1} parent=43 // loop_footer_branch
                %203 = sbr.rel target = $region46
              $region51: #{dd3d_video_prediction4_forward.1} parent=43 // loop_exit
                _
            $region44: #{dd3d_video_prediction4_forward.1} parent=35 // pred_fallthru
              _
          $region36: #{dd3d_video_prediction4_forward.1} parent=31 // pred_fallthru
            _
          %247 = vnop
        $region32: #{dd3d_video_prediction4_forward.1} parent=27 // pred_fallthru
          _
      $region28: #{dd3d_video_prediction4_forward.1} parent=5 // pred_fallthru
        _
      %p248 = scmp.le.s32.totalorder 1, %s15
      %p249 = scmp.lt.s32.totalorder %s15, 3
      %p250 = pnand %p248, %p249
      %p251 = pneg %p250
      // Predicated region
      $region67: #{dd3d_video_prediction4_forward.1} parent=5 // pred_check
        _
      $region68: #{dd3d_video_prediction4_forward.1} parent=5 // pred_check_branch
        %253 = sbr.rel (%p250) target = $region70
      $region69: #{dd3d_video_prediction4_forward.1} parent=5 // pred_region
        %s254 = ssub.s32 %s15, 1
        %s255 = sand.u32 %s28, 1
        %s256 = sand.u32 %s28, 1
        %s257 = smul.addr %s256, 48
        %s258 = scalar_lea.vmem [#allocation2], %s257
        // Predicated region
        $region71: #{dd3d_video_prediction4_forward.1} parent=69 // pred_check
          %p259 = pneg %p41
        $region72: #{dd3d_video_prediction4_forward.1} parent=69 // pred_check_branch
          %261 = sbr.rel (%p259) target = $region74
        $region73: #{dd3d_video_prediction4_forward.1} parent=69 // pred_region
          _
        $region74: #{dd3d_video_prediction4_forward.1} parent=69 // pred_fallthru
          _
        %s262 = sand.u32 %s28, 1
        %s263 = sand.u32 %s28, 1
        %s264 = smul.addr %s263, 48
        %s265 = scalar_lea.vmem [#allocation2], %s264
        %p266 = pneg %p41
        %p267 = pneg %p38
        %p268 = pneg %p62
        %p269 = pneg %p59
        %p270 = pneg %p83
        %p271 = pneg %p80
        %p272 = pneg %p104
        %p273 = pneg %p101
        %p274 = pneg %p130
        %p275 = pneg %p127
        %s276 = sand.u32 %s117, 1
        %s277 = scalar_lea.sflag [#allocation4], %s276
        %s278 = sand.u32 %s117, 1
        %s279 = smul.addr %s278, 16
        %s280 = scalar_lea.vmem [#allocation3], %s279
        %p281 = pneg %p156
        %p282 = pneg %p153
        %s283 = smul.u32 2, %s20
        %p284 = scmp.lt.s32.totalorder %s283, 3
        %s285 = scalar_select %p284, %s283, 3
        %s286 = smul.addr %s285, 8
        %s287 = scalar_lea.vmem %s5, %s286
        %s288 = smul.u32 2, %s20
        %s289 = smul.u32 2, %s20
        %s290 = smul.u32 2, %s20
        %p291 = scmp.lt.s32.totalorder %s290, 3
        %s292 = scalar_select %p291, %s290, 3
        %s293 = smul.addr %s292, 8
        %s294 = scalar_lea.vmem %s5, %s293
        %s295 = smul.u32 2, %s20
        %v297 = vld [vmem:[%s3] sm:$0xff]
        %v298 = vld [vmem:[%s3 + $0x8] sm:$0xff]
        %v299 = vld [vmem:[%s3 + $0x10] sm:$0xff]
        %vm300 = vcmp.gt.f32.partialorder %v297, 0.5
        %v301 = vld [vmem:[%s258] sm:$0xff]
        %v302 = vld [vmem:[%s258 + $0x8] sm:$0xff]
        %v303 = vld [vmem:[%s258 + $0x10] sm:$0xff]
        %v304 = vld [vmem:[%s258 + $0x18] sm:$0xff]
        %v305 = vld [vmem:[%s258 + $0x20] sm:$0xff]
        %v306 = vld [vmem:[%s258 + $0x28] sm:$0xff]
        %v307 = vld [vmem:[%s1] sm:$0xf]
        %v308 = vld [vmem:[%s1 + $0x4] sm:$0xf]
        %v309 = vld [vmem:[%s1 + $0x8] sm:$0xf]
        %v310 = vld [vmem:[%s1 + $0xc] sm:$0xf]
        %v311 = vld [vmem:[%s1 + $0x10] sm:$0xf]
        %v312 = vld [vmem:[%s1 + $0x14] sm:$0xf]
        %v313 = vld [vmem:[%s1 + $0x18] sm:$0xf]
        %v314 = vld [vmem:[%s1 + $0x1c] sm:$0xf]
        %v315 = vld [vmem:[%s1 + $0x20] sm:$0xf]
        %v316 = vld [vmem:[%s1 + $0x24] sm:$0xf]
        %v317 = vld [vmem:[%s1 + $0x28] sm:$0xf]
        %v318 = vld [vmem:[%s1 + $0x2c] sm:$0xf]
        %v319 = vld [vmem:[%s1 + $0x30] sm:$0xf]
        %v320 = vld [vmem:[%s1 + $0x34] sm:$0xf]
        %v321 = vld [vmem:[%s1 + $0x38] sm:$0xf]
        %v322 = vld [vmem:[%s1 + $0x3c] sm:$0xf]
        %v323 = vld [vmem:[%s1 + $0x40] sm:$0xf]
        %v324 = vld [vmem:[%s1 + $0x44] sm:$0xf]
        %v325 = vld [vmem:[%s1 + $0x48] sm:$0xf]
        %v326 = vld [vmem:[%s1 + $0x4c] sm:$0xf]
        %v327 = vld [vmem:[%s1 + $0x50] sm:$0xf]
        %v328 = vld [vmem:[%s1 + $0x54] sm:$0xf]
        %v329 = vld [vmem:[%s1 + $0x58] sm:$0xf]
        %v330 = vld [vmem:[%s1 + $0x5c] sm:$0xf]
        %v331 = vlaneseq
        %v332 = vshrl.u32 %v331, 7
        %v333 = vsub.s32 0, %v332
        %v334 = vrot.slane %v297, %v333
        %v341 = vunpack.c.l.b16 %v301
        %v342 = vunpack.c.h.b16 %v301
        %v343 = vunpack.c.l.b16 %v302
        %v344 = vunpack.c.h.b16 %v302
        %v345 = vunpack.c.l.b16 %v303
        %v346 = vunpack.c.h.b16 %v303
        %v347 = vunpack.c.l.b16 %v304
        %v348 = vunpack.c.h.b16 %v304
        %v349 = vunpack.c.l.b16 %v305
        %v350 = vunpack.c.h.b16 %v305
        %v351 = vunpack.c.l.b16 %v306
        %v352 = vunpack.c.h.b16 %v306
        %v353 = vpack.c.b16 %v343, %v341
        %v354 = vpack.c.b16 %v344, %v342
        %v355 = vpack.c.b16 %v347, %v345
        %v356 = vpack.c.b16 %v348, %v346
        %v357 = vpack.c.b16 %v351, %v349
        %v358 = vpack.c.b16 %v352, %v350
        %v386 = vunpack.c.l.b16 %v307
        %v387 = vunpack.c.l.b16 %v308
        %v388 = vunpack.c.l.b16 %v309
        %v389 = vunpack.c.l.b16 %v310
        %v390 = vunpack.c.l.b16 %v311
        %v391 = vunpack.c.l.b16 %v312
        %v392 = vunpack.c.l.b16 %v313
        %v393 = vunpack.c.l.b16 %v314
        %v394 = vunpack.c.l.b16 %v315
        %v395 = vunpack.c.l.b16 %v316
        %v396 = vunpack.c.l.b16 %v317
        %v397 = vunpack.c.l.b16 %v318
        %v398 = vunpack.c.l.b16 %v319
        %v399 = vunpack.c.l.b16 %v320
        %v400 = vunpack.c.l.b16 %v321
        %v401 = vunpack.c.l.b16 %v322
        %v402 = vunpack.c.l.b16 %v323
        %v403 = vunpack.c.l.b16 %v324
        %v404 = vunpack.c.l.b16 %v325
        %v405 = vunpack.c.l.b16 %v326
        %v406 = vunpack.c.l.b16 %v327
        %v407 = vunpack.c.l.b16 %v328
        %v408 = vunpack.c.l.b16 %v329
        %v409 = vunpack.c.l.b16 %v330
        %v410 = vpack.c.b16 %v387, %v386
        %v411 = vpack.c.b16 %v389, %v388
        %v412 = vpack.c.b16 %v391, %v390
        %v413 = vpack.c.b16 %v393, %v392
        %v414 = vpack.c.b16 %v395, %v394
        %v415 = vpack.c.b16 %v397, %v396
        %v416 = vpack.c.b16 %v399, %v398
        %v417 = vpack.c.b16 %v401, %v400
        %v418 = vpack.c.b16 %v403, %v402
        %v419 = vpack.c.b16 %v405, %v404
        %v420 = vpack.c.b16 %v407, %v406
        %v421 = vpack.c.b16 %v409, %v408
        %vm434 = vcmask 523264
        %v436 = vsel %vm434, %v354, 0
        %v439 = vsel %vm434, %v356, 0
        %v442 = vsel %vm434, %v358, 0
        %444 = vmatprep.subr.bf16.mxu0 0
        %445 = vmatpush1.bf16.msra.mxu0 %v417
        %446 = vmatprep.subr.bf16.mxu0 0
        %447 = vmatpush1.bf16.msra.mxu0 %v416
        %448 = vmatprep.subr.bf16.mxu0 0
        %449 = vmatpush1.bf16.msra.mxu0 %v415
        %450 = vmatprep.subr.bf16.mxu0 0
        %451 = vmatpush1.bf16.msra.mxu0 %v414
        %452 = vmatprep.subr.bf16.mxu0 0
        %453 = vmatpush1.bf16.msra.mxu0 %v413
        %454 = vmatprep.subr.bf16.mxu0 0
        %455 = vmatpush1.bf16.msra.mxu0 %v412
        %456 = vmatprep.subr.bf16.mxu0 0
        %457 = vmatpush1.bf16.msra.mxu0 %v411
        %458 = vmatprep.subr.bf16.mxu0 0
        %459 = vmatpush1.bf16.msra.mxu0 %v410
        %460 = vmatprep.subr.bf16.mxu0 0
        %461 = vmatpush2.bf16.msra.mxu0 0
        %462 = vmatprep.subr.bf16.mxu0 0
        %463 = vmatpush2.bf16.msra.mxu0 0
        %464 = vmatprep.subr.bf16.mxu0 0
        %465 = vmatpush2.bf16.msra.mxu0 0
        %466 = vmatprep.subr.bf16.mxu0 0
        %467 = vmatpush2.bf16.msra.mxu0 0
        %468 = vmatprep.subr.bf16.mxu0 0
        %469 = vmatpush2.bf16.msra.mxu0 %v421
        %470 = vmatprep.subr.bf16.mxu0 0
        %471 = vmatpush2.bf16.msra.mxu0 %v420
        %472 = vmatprep.subr.bf16.mxu0 0
        %473 = vmatpush2.bf16.msra.mxu0 %v419
        %474 = vmatprep.subr.bf16.mxu0 0
        %475 = vmatpush2.bf16.msra.mxu0 %v418
        %476 = vmatprep.mubr.bf16.mxu0 %v436
        %477 = vmatmul.mubr.bf16.gmra.mxu0 %v353
        %v478 = vpop.f32.mrf.mxu0
        %v479 = vadd.f32 %v334, %v478
        %v480 = vpop.f32.mrf.mxu0
        %v481 = vpop.f32.mrf.mxu0
        %v482 = vadd.f32 %v334, %v481
        %v483 = vpop.f32.mrf.mxu0
        %484 = vmatprep.mubr.bf16.mxu0 %v439
        %485 = vmatmul.mubr.bf16.gmra.mxu0 %v355
        %v486 = vpop.f32.mrf.mxu0
        %v487 = vadd.f32 %v334, %v486
        %v488 = vpop.f32.mrf.mxu0
        %v489 = vpop.f32.mrf.mxu0
        %v490 = vadd.f32 %v334, %v489
        %v491 = vpop.f32.mrf.mxu0
        %492 = vmatprep.mubr.bf16.mxu0 %v442
        %493 = vmatmul.mubr.bf16.gmra.mxu0 %v357
        %v494 = vpop.f32.mrf.mxu0
        %v495 = vadd.f32 %v334, %v494
        %v496 = vpop.f32.mrf.mxu0
        %v497 = vpop.f32.mrf.mxu0
        %v498 = vadd.f32 %v334, %v497
        %v499 = vpop.f32.mrf.mxu0
        %500 = vdwg.mxu0
        %v501 = vmax.f32 %v479, 0.0
        %v502 = vmax.f32 %v482, 0.0
        %v503 = vmax.f32 %v487, 0.0
        %v504 = vmax.f32 %v490, 0.0
        %v505 = vmax.f32 %v495, 0.0
        %v506 = vmax.f32 %v498, 0.0
        %v507 = vadd.f32 %v503, %v505
        %v508 = vadd.f32 %v504, %v506
        %v509 = vmul.f32 %v507, 0.5
        %v510 = vmul.f32 %v508, 0.5
        %v511 = vpack.c.bf16 %v510, %v509
        %v512 = vld [vmem:[%s1 + $0x60] sm:$0xf]
        %v513 = vld [vmem:[%s1 + $0x64] sm:$0xf]
        %v514 = vld [vmem:[%s1 + $0x68] sm:$0xf]
        %v515 = vld [vmem:[%s1 + $0x6c] sm:$0xf]
        %v516 = vld [vmem:[%s1 + $0x70] sm:$0xf]
        %v517 = vld [vmem:[%s1 + $0x74] sm:$0xf]
        %v518 = vld [vmem:[%s1 + $0x78] sm:$0xf]
        %v519 = vld [vmem:[%s1 + $0x7c] sm:$0xf]
        %v520 = vld [vmem:[%s1 + $0x80] sm:$0xf]
        %v521 = vld [vmem:[%s1 + $0x84] sm:$0xf]
        %v522 = vld [vmem:[%s1 + $0x88] sm:$0xf]
        %v523 = vld [vmem:[%s1 + $0x8c] sm:$0xf]
        %v524 = vld [vmem:[%s1 + $0x90] sm:$0xf]
        %v525 = vld [vmem:[%s1 + $0x94] sm:$0xf]
        %v526 = vld [vmem:[%s1 + $0x98] sm:$0xf]
        %v527 = vld [vmem:[%s1 + $0x9c] sm:$0xf]
        %v528 = vlaneseq
        %v529 = vshrl.u32 %v528, 7
        %v530 = vsub.s32 1, %v529
        %v531 = vrot.slane %v297, %v530
        %v548 = vunpack.c.l.b16 %v512
        %v549 = vunpack.c.l.b16 %v513
        %v550 = vunpack.c.l.b16 %v514
        %v551 = vunpack.c.l.b16 %v515
        %v552 = vunpack.c.l.b16 %v516
        %v553 = vunpack.c.l.b16 %v517
        %v554 = vunpack.c.l.b16 %v518
        %v555 = vunpack.c.l.b16 %v519
        %v556 = vunpack.c.l.b16 %v520
        %v557 = vunpack.c.l.b16 %v521
        %v558 = vunpack.c.l.b16 %v522
        %v559 = vunpack.c.l.b16 %v523
        %v560 = vunpack.c.l.b16 %v524
        %v561 = vunpack.c.l.b16 %v525
        %v562 = vunpack.c.l.b16 %v526
        %v563 = vunpack.c.l.b16 %v527
        %v564 = vpack.c.b16 %v549, %v548
        %v565 = vpack.c.b16 %v551, %v550
        %v566 = vpack.c.b16 %v553, %v552
        %v567 = vpack.c.b16 %v555, %v554
        %v568 = vpack.c.b16 %v557, %v556
        %v569 = vpack.c.b16 %v559, %v558
        %v570 = vpack.c.b16 %v561, %v560
        %v571 = vpack.c.b16 %v563, %v562
        %580 = vmatprep.subr.bf16.mxu0 0
        %581 = vmatpush1.bf16.msra.mxu0 %v571
        %582 = vmatprep.subr.bf16.mxu0 0
        %583 = vmatpush1.bf16.msra.mxu0 %v570
        %584 = vmatprep.subr.bf16.mxu0 0
        %585 = vmatpush1.bf16.msra.mxu0 %v569
        %586 = vmatprep.subr.bf16.mxu0 0
        %587 = vmatpush1.bf16.msra.mxu0 %v568
        %588 = vmatprep.subr.bf16.mxu0 0
        %589 = vmatpush1.bf16.msra.mxu0 %v567
        %590 = vmatprep.subr.bf16.mxu0 0
        %591 = vmatpush1.bf16.msra.mxu0 %v566
        %592 = vmatprep.subr.bf16.mxu0 0
        %593 = vmatpush1.bf16.msra.mxu0 %v565
        %594 = vmatprep.subr.bf16.mxu0 0
        %595 = vmatpush1.bf16.msra.mxu0 %v564
        %596 = vmatprep.subr.bf16.mxu0 0
        %597 = vmatpush2.bf16.msra.mxu0 0
        %598 = vmatprep.subr.bf16.mxu0 0
        %599 = vmatpush2.bf16.msra.mxu0 0
        %600 = vmatprep.subr.bf16.mxu0 0
        %601 = vmatpush2.bf16.msra.mxu0 0
        %602 = vmatprep.subr.bf16.mxu0 0
        %603 = vmatpush2.bf16.msra.mxu0 0
        %604 = vmatprep.subr.bf16.mxu0 0
        %605 = vmatpush2.bf16.msra.mxu0 0
        %606 = vmatprep.subr.bf16.mxu0 0
        %607 = vmatpush2.bf16.msra.mxu0 0
        %608 = vmatprep.subr.bf16.mxu0 0
        %609 = vmatpush2.bf16.msra.mxu0 0
        %610 = vmatprep.subr.bf16.mxu0 0
        %611 = vmatpush2.bf16.msra.mxu0 0
        %612 = vmatprep.mubr.bf16.mxu0 0
        %613 = vmatmul.mubr.bf16.gmra.mxu0 %v511
        %v614 = vpop.f32.mrf.mxu0
        %v615 = vadd.f32 %v531, %v614
        %v616 = vpop.f32.mrf.mxu0
        %v617 = vpop.f32.mrf.mxu0
        %v618 = vadd.f32 %v531, %v617
        %v619 = vpop.f32.mrf.mxu0
        %620 = vdwg.mxu0
        %v621 = vadd.f32 %v501, %v615
        %v622 = vadd.f32 %v502, %v618
        %623 = vst [vmem:[%s280] sm:$0xff] %v621
        %624 = vst [vmem:[%s280 + $0x8] sm:$0xff] %v622
        %v625 = vpack.c.bf16 %v622, %v621
        %v626 = vld [vmem:[%s2] sm:$0xff]
        %v627 = vld [vmem:[%s2 + $0x8] sm:$0xf]
        %v628 = vld [vmem:[%s2 + $0xc] sm:$0xff]
        %v629 = vld [vmem:[%s2 + $0x14] sm:$0xf]
        %v630 = vld [vmem:[%s2 + $0x18] sm:$0xff]
        %v631 = vld [vmem:[%s2 + $0x20] sm:$0xf]
        %v632 = vld [vmem:[%s2 + $0x24] sm:$0xff]
        %v633 = vld [vmem:[%s2 + $0x2c] sm:$0xf]
        %v634 = vld [vmem:[%s2 + $0x30] sm:$0xff]
        %v635 = vld [vmem:[%s2 + $0x38] sm:$0xf]
        %v636 = vld [vmem:[%s2 + $0x3c] sm:$0xff]
        %v637 = vld [vmem:[%s2 + $0x44] sm:$0xf]
        %v638 = vld [vmem:[%s2 + $0x48] sm:$0xff]
        %v639 = vld [vmem:[%s2 + $0x50] sm:$0xf]
        %v640 = vld [vmem:[%s2 + $0x54] sm:$0xff]
        %v641 = vld [vmem:[%s2 + $0x5c] sm:$0xf]
        %v642 = vld [vmem:[%s2 + $0x60] sm:$0xff]
        %v643 = vld [vmem:[%s2 + $0x68] sm:$0xf]
        %v644 = vld [vmem:[%s2 + $0x6c] sm:$0xff]
        %v645 = vld [vmem:[%s2 + $0x74] sm:$0xf]
        %v646 = vld [vmem:[%s2 + $0x78] sm:$0xff]
        %v647 = vld [vmem:[%s2 + $0x80] sm:$0xf]
        %v648 = vld [vmem:[%s2 + $0x84] sm:$0xff]
        %v649 = vld [vmem:[%s2 + $0x8c] sm:$0xf]
        %v650 = vld [vmem:[%s2 + $0x90] sm:$0xff]
        %v651 = vld [vmem:[%s2 + $0x98] sm:$0xf]
        %v652 = vld [vmem:[%s2 + $0x9c] sm:$0xff]
        %v653 = vld [vmem:[%s2 + $0xa4] sm:$0xf]
        %v654 = vld [vmem:[%s2 + $0xa8] sm:$0xff]
        %v655 = vld [vmem:[%s2 + $0xb0] sm:$0xf]
        %v656 = vld [vmem:[%s2 + $0xb4] sm:$0xff]
        %v657 = vld [vmem:[%s2 + $0xbc] sm:$0xf]
        %v658 = vlaneseq
        %v659 = vshrl.u32 %v658, 7
        %v660 = vsub.s32 2, %v659
        %v661 = vrot.slane %v297, %v660
        %v662 = vlaneseq
        %v663 = vshrl.u32 %v662, 7
        %v664 = vsub.s32 2, %v663
        %v665 = vrot.slane %v298, %v664
        %v666 = vlaneseq
        %v667 = vshrl.u32 %v666, 7
        %v668 = vsub.s32 2, %v667
        %v669 = vrot.slane %v299, %v668
        %v702 = vunpack.c.l.b16 %v626
        %v703 = vunpack.c.h.b16 %v626
        %v704 = vunpack.c.l.b16 %v627
        %v705 = vunpack.c.l.b16 %v628
        %v706 = vunpack.c.h.b16 %v628
        %v707 = vunpack.c.l.b16 %v629
        %v708 = vunpack.c.l.b16 %v630
        %v709 = vunpack.c.h.b16 %v630
        %v710 = vunpack.c.l.b16 %v631
        %v711 = vunpack.c.l.b16 %v632
        %v712 = vunpack.c.h.b16 %v632
        %v713 = vunpack.c.l.b16 %v633
        %v714 = vunpack.c.l.b16 %v634
        %v715 = vunpack.c.h.b16 %v634
        %v716 = vunpack.c.l.b16 %v635
        %v717 = vunpack.c.l.b16 %v636
        %v718 = vunpack.c.h.b16 %v636
        %v719 = vunpack.c.l.b16 %v637
        %v720 = vunpack.c.l.b16 %v638
        %v721 = vunpack.c.h.b16 %v638
        %v722 = vunpack.c.l.b16 %v639
        %v723 = vunpack.c.l.b16 %v640
        %v724 = vunpack.c.h.b16 %v640
        %v725 = vunpack.c.l.b16 %v641
        %v726 = vunpack.c.l.b16 %v642
        %v727 = vunpack.c.h.b16 %v642
        %v728 = vunpack.c.l.b16 %v643
        %v729 = vunpack.c.l.b16 %v644
        %v730 = vunpack.c.h.b16 %v644
        %v731 = vunpack.c.l.b16 %v645
        %v732 = vunpack.c.l.b16 %v646
        %v733 = vunpack.c.h.b16 %v646
        %v734 = vunpack.c.l.b16 %v647
        %v735 = vunpack.c.l.b16 %v648
        %v736 = vunpack.c.h.b16 %v648
        %v737 = vunpack.c.l.b16 %v649
        %v738 = vunpack.c.l.b16 %v650
        %v739 = vunpack.c.h.b16 %v650
        %v740 = vunpack.c.l.b16 %v651
        %v741 = vunpack.c.l.b16 %v652
        %v742 = vunpack.c.h.b16 %v652
        %v743 = vunpack.c.l.b16 %v653
        %v744 = vunpack.c.l.b16 %v654
        %v745 = vunpack.c.h.b16 %v654
        %v746 = vunpack.c.l.b16 %v655
        %v747 = vunpack.c.l.b16 %v656
        %v748 = vunpack.c.h.b16 %v656
        %v749 = vunpack.c.l.b16 %v657
        %v750 = vpack.c.b16 %v705, %v702
        %v751 = vpack.c.b16 %v706, %v703
        %v752 = vpack.c.b16 %v707, %v704
        %v753 = vpack.c.b16 %v711, %v708
        %v754 = vpack.c.b16 %v712, %v709
        %v755 = vpack.c.b16 %v713, %v710
        %v756 = vpack.c.b16 %v717, %v714
        %v757 = vpack.c.b16 %v718, %v715
        %v758 = vpack.c.b16 %v719, %v716
        %v759 = vpack.c.b16 %v723, %v720
        %v760 = vpack.c.b16 %v724, %v721
        %v761 = vpack.c.b16 %v725, %v722
        %v762 = vpack.c.b16 %v729, %v726
        %v763 = vpack.c.b16 %v730, %v727
        %v764 = vpack.c.b16 %v731, %v728
        %v765 = vpack.c.b16 %v735, %v732
        %v766 = vpack.c.b16 %v736, %v733
        %v767 = vpack.c.b16 %v737, %v734
        %v768 = vpack.c.b16 %v741, %v738
        %v769 = vpack.c.b16 %v742, %v739
        %v770 = vpack.c.b16 %v743, %v740
        %v771 = vpack.c.b16 %v747, %v744
        %v772 = vpack.c.b16 %v748, %v745
        %v773 = vpack.c.b16 %v749, %v746
        %798 = vmatprep.subr.bf16.mxu0 %v772
        %799 = vmatpush1.bf16.msra.mxu0 %v771
        %800 = vmatprep.subr.bf16.mxu0 %v769
        %801 = vmatpush1.bf16.msra.mxu0 %v768
        %802 = vmatprep.subr.bf16.mxu0 %v766
        %803 = vmatpush1.bf16.msra.mxu0 %v765
        %804 = vmatprep.subr.bf16.mxu0 %v763
        %805 = vmatpush1.bf16.msra.mxu0 %v762
        %806 = vmatprep.subr.bf16.mxu0 %v760
        %807 = vmatpush1.bf16.msra.mxu0 %v759
        %808 = vmatprep.subr.bf16.mxu0 %v757
        %809 = vmatpush1.bf16.msra.mxu0 %v756
        %810 = vmatprep.subr.bf16.mxu0 %v754
        %811 = vmatpush1.bf16.msra.mxu0 %v753
        %812 = vmatprep.subr.bf16.mxu0 %v751
        %813 = vmatpush1.bf16.msra.mxu0 %v750
        %814 = vmatprep.subr.bf16.mxu0 0
        %815 = vmatpush2.bf16.msra.mxu0 0
        %816 = vmatprep.subr.bf16.mxu0 0
        %817 = vmatpush2.bf16.msra.mxu0 0
        %818 = vmatprep.subr.bf16.mxu0 0
        %819 = vmatpush2.bf16.msra.mxu0 0
        %820 = vmatprep.subr.bf16.mxu0 0
        %821 = vmatpush2.bf16.msra.mxu0 0
        %822 = vmatprep.subr.bf16.mxu0 0
        %823 = vmatpush2.bf16.msra.mxu0 0
        %824 = vmatprep.subr.bf16.mxu0 0
        %825 = vmatpush2.bf16.msra.mxu0 0
        %826 = vmatprep.subr.bf16.mxu0 0
        %827 = vmatpush2.bf16.msra.mxu0 0
        %828 = vmatprep.subr.bf16.mxu0 0
        %829 = vmatpush2.bf16.msra.mxu0 0
        %830 = vmatprep.mubr.bf16.mxu0 0
        %831 = vmatmul.mubr.bf16.gmra.mxu0 %v625
        %v832 = vpop.f32.mrf.mxu0
        %v833 = vadd.f32 %v661, %v832
        %v834 = vpop.f32.mrf.mxu0
        %v835 = vadd.f32 %v665, %v834
        %v836 = vpop.f32.mrf.mxu0
        %v837 = vadd.f32 %v661, %v836
        %v838 = vpop.f32.mrf.mxu0
        %v839 = vadd.f32 %v665, %v838
        %840 = vdwg.mxu0
        %841 = vmatprep.subr.bf16.mxu0 0
        %842 = vmatpush1.bf16.msra.mxu0 %v773
        %843 = vmatprep.subr.bf16.mxu0 0
        %844 = vmatpush1.bf16.msra.mxu0 %v770
        %845 = vmatprep.subr.bf16.mxu0 0
        %846 = vmatpush1.bf16.msra.mxu0 %v767
        %847 = vmatprep.subr.bf16.mxu0 0
        %848 = vmatpush1.bf16.msra.mxu0 %v764
        %849 = vmatprep.subr.bf16.mxu0 0
        %850 = vmatpush1.bf16.msra.mxu0 %v761
        %851 = vmatprep.subr.bf16.mxu0 0
        %852 = vmatpush1.bf16.msra.mxu0 %v758
        %853 = vmatprep.subr.bf16.mxu0 0
        %854 = vmatpush1.bf16.msra.mxu0 %v755
        %855 = vmatprep.subr.bf16.mxu0 0
        %856 = vmatpush1.bf16.msra.mxu0 %v752
        %857 = vmatprep.subr.bf16.mxu0 0
        %858 = vmatpush2.bf16.msra.mxu0 0
        %859 = vmatprep.subr.bf16.mxu0 0
        %860 = vmatpush2.bf16.msra.mxu0 0
        %861 = vmatprep.subr.bf16.mxu0 0
        %862 = vmatpush2.bf16.msra.mxu0 0
        %863 = vmatprep.subr.bf16.mxu0 0
        %864 = vmatpush2.bf16.msra.mxu0 0
        %865 = vmatprep.subr.bf16.mxu0 0
        %866 = vmatpush2.bf16.msra.mxu0 0
        %867 = vmatprep.subr.bf16.mxu0 0
        %868 = vmatpush2.bf16.msra.mxu0 0
        %869 = vmatprep.subr.bf16.mxu0 0
        %870 = vmatpush2.bf16.msra.mxu0 0
        %871 = vmatprep.subr.bf16.mxu0 0
        %872 = vmatpush2.bf16.msra.mxu0 0
        %873 = vmatprep.mubr.bf16.mxu0 0
        %874 = vmatmul.mubr.bf16.gmra.mxu0 %v625
        %v875 = vpop.f32.mrf.mxu0
        %v876 = vadd.f32 %v669, %v875
        %v877 = vpop.f32.mrf.mxu0
        %v878 = vpop.f32.mrf.mxu0
        %v879 = vadd.f32 %v669, %v878
        %v880 = vpop.f32.mrf.mxu0
        %881 = vdwg.mxu0
        %v882 = vmax.f32 %v833, 0.0
        %v883 = vmax.f32 %v835, 0.0
        %v884 = vmax.f32 %v876, 0.0
        %v885 = vmax.f32 %v837, 0.0
        %v886 = vmax.f32 %v839, 0.0
        %v887 = vmax.f32 %v879, 0.0
        %v888 = vpack.c.bf16 %v885, %v882
        %v889 = vpack.c.bf16 %v886, %v883
        %v890 = vpack.c.bf16 %v887, %v884
        %v891 = vld [vmem:[%s1 + $0xa0] sm:$0xf]
        %v892 = vld [vmem:[%s1 + $0xa4] sm:$0xf]
        %v893 = vld [vmem:[%s1 + $0xa8] sm:$0xf]
        %v894 = vld [vmem:[%s1 + $0xac] sm:$0xf]
        %v895 = vld [vmem:[%s1 + $0xb0] sm:$0xf]
        %v896 = vld [vmem:[%s1 + $0xb4] sm:$0xf]
        %v897 = vld [vmem:[%s1 + $0xb8] sm:$0xf]
        %v898 = vld [vmem:[%s1 + $0xbc] sm:$0xf]
        %v899 = vld [vmem:[%s1 + $0xc0] sm:$0xf]
        %v900 = vld [vmem:[%s1 + $0xc4] sm:$0xf]
        %v901 = vld [vmem:[%s1 + $0xc8] sm:$0xf]
        %v902 = vld [vmem:[%s1 + $0xcc] sm:$0xf]
        %v903 = vld [vmem:[%s1 + $0xd0] sm:$0xf]
        %v904 = vld [vmem:[%s1 + $0xd4] sm:$0xf]
        %v905 = vld [vmem:[%s1 + $0xd8] sm:$0xf]
        %v906 = vld [vmem:[%s1 + $0xdc] sm:$0xf]
        %v907 = vlaneseq
        %v908 = vshrl.u32 %v907, 7
        %v909 = vsub.s32 3, %v908
        %v910 = vrot.slane %v297, %v909
        %v927 = vunpack.c.l.b16 %v891
        %v928 = vunpack.c.l.b16 %v892
        %v929 = vunpack.c.l.b16 %v893
        %v930 = vunpack.c.l.b16 %v894
        %v931 = vunpack.c.l.b16 %v895
        %v932 = vunpack.c.l.b16 %v896
        %v933 = vunpack.c.l.b16 %v897
        %v934 = vunpack.c.l.b16 %v898
        %v935 = vunpack.c.l.b16 %v899
        %v936 = vunpack.c.l.b16 %v900
        %v937 = vunpack.c.l.b16 %v901
        %v938 = vunpack.c.l.b16 %v902
        %v939 = vunpack.c.l.b16 %v903
        %v940 = vunpack.c.l.b16 %v904
        %v941 = vunpack.c.l.b16 %v905
        %v942 = vunpack.c.l.b16 %v906
        %v943 = vpack.c.b16 %v928, %v927
        %v944 = vpack.c.b16 %v930, %v929
        %v945 = vpack.c.b16 %v932, %v931
        %v946 = vpack.c.b16 %v934, %v933
        %v947 = vpack.c.b16 %v936, %v935
        %v948 = vpack.c.b16 %v938, %v937
        %v949 = vpack.c.b16 %v940, %v939
        %v950 = vpack.c.b16 %v942, %v941
        %959 = vmatprep.subr.bf16.mxu0 0
        %960 = vmatpush1.bf16.msra.mxu0 %v950
        %961 = vmatprep.subr.bf16.mxu0 0
        %962 = vmatpush1.bf16.msra.mxu0 %v949
        %963 = vmatprep.subr.bf16.mxu0 0
        %964 = vmatpush1.bf16.msra.mxu0 %v948
        %965 = vmatprep.subr.bf16.mxu0 0
        %966 = vmatpush1.bf16.msra.mxu0 %v947
        %967 = vmatprep.subr.bf16.mxu0 0
        %968 = vmatpush1.bf16.msra.mxu0 %v946
        %969 = vmatprep.subr.bf16.mxu0 0
        %970 = vmatpush1.bf16.msra.mxu0 %v945
        %971 = vmatprep.subr.bf16.mxu0 0
        %972 = vmatpush1.bf16.msra.mxu0 %v944
        %973 = vmatprep.subr.bf16.mxu0 0
        %974 = vmatpush1.bf16.msra.mxu0 %v943
        %975 = vmatprep.subr.bf16.mxu0 0
        %976 = vmatpush2.bf16.msra.mxu0 0
        %977 = vmatprep.subr.bf16.mxu0 0
        %978 = vmatpush2.bf16.msra.mxu0 0
        %979 = vmatprep.subr.bf16.mxu0 0
        %980 = vmatpush2.bf16.msra.mxu0 0
        %981 = vmatprep.subr.bf16.mxu0 0
        %982 = vmatpush2.bf16.msra.mxu0 0
        %983 = vmatprep.subr.bf16.mxu0 0
        %984 = vmatpush2.bf16.msra.mxu0 0
        %985 = vmatprep.subr.bf16.mxu0 0
        %986 = vmatpush2.bf16.msra.mxu0 0
        %987 = vmatprep.subr.bf16.mxu0 0
        %988 = vmatpush2.bf16.msra.mxu0 0
        %989 = vmatprep.subr.bf16.mxu0 0
        %990 = vmatpush2.bf16.msra.mxu0 0
        %991 = vmatprep.mubr.bf16.mxu0 0
        %992 = vmatmul.mubr.bf16.gmra.mxu0 %v888
        %v993 = vpop.f32.mrf.mxu0
        %v994 = vadd.f32 %v910, %v993
        %v995 = vpop.f32.mrf.mxu0
        %v996 = vpop.f32.mrf.mxu0
        %v997 = vadd.f32 %v910, %v996
        %v998 = vpop.f32.mrf.mxu0
        %999 = vdwg.mxu0
        %v1000 = vmax.f32 %v994, 0.0
        %v1001 = vmax.f32 %v997, 0.0
        %v1002 = vpack.c.bf16 %v1001, %v1000
        %v1003 = vld [vmem:[%s1 + $0xe0] sm:$0xf]
        %v1004 = vld [vmem:[%s1 + $0xe4] sm:$0xf]
        %v1005 = vld [vmem:[%s1 + $0xe8] sm:$0xf]
        %v1006 = vld [vmem:[%s1 + $0xec] sm:$0xf]
        %v1007 = vld [vmem:[%s1 + $0xf0] sm:$0xf]
        %v1008 = vld [vmem:[%s1 + $0xf4] sm:$0xf]
        %v1009 = vld [vmem:[%s1 + $0xf8] sm:$0xf]
        %v1010 = vld [vmem:[%s1 + $0xfc] sm:$0xf]
        %v1011 = vld [vmem:[%s1 + $0x100] sm:$0xf]
        %v1012 = vld [vmem:[%s1 + $0x104] sm:$0xf]
        %v1013 = vld [vmem:[%s1 + $0x108] sm:$0xf]
        %v1014 = vld [vmem:[%s1 + $0x10c] sm:$0xf]
        %v1015 = vld [vmem:[%s1 + $0x110] sm:$0xf]
        %v1016 = vld [vmem:[%s1 + $0x114] sm:$0xf]
        %v1017 = vld [vmem:[%s1 + $0x118] sm:$0xf]
        %v1018 = vld [vmem:[%s1 + $0x11c] sm:$0xf]
        %v1019 = vlaneseq
        %v1020 = vshrl.u32 %v1019, 7
        %v1021 = vsub.s32 4, %v1020
        %v1022 = vrot.slane %v297, %v1021
        %v1039 = vunpack.c.l.b16 %v1003
        %v1040 = vunpack.c.l.b16 %v1004
        %v1041 = vunpack.c.l.b16 %v1005
        %v1042 = vunpack.c.l.b16 %v1006
        %v1043 = vunpack.c.l.b16 %v1007
        %v1044 = vunpack.c.l.b16 %v1008
        %v1045 = vunpack.c.l.b16 %v1009
        %v1046 = vunpack.c.l.b16 %v1010
        %v1047 = vunpack.c.l.b16 %v1011
        %v1048 = vunpack.c.l.b16 %v1012
        %v1049 = vunpack.c.l.b16 %v1013
        %v1050 = vunpack.c.l.b16 %v1014
        %v1051 = vunpack.c.l.b16 %v1015
        %v1052 = vunpack.c.l.b16 %v1016
        %v1053 = vunpack.c.l.b16 %v1017
        %v1054 = vunpack.c.l.b16 %v1018
        %v1055 = vpack.c.b16 %v1040, %v1039
        %v1056 = vpack.c.b16 %v1042, %v1041
        %v1057 = vpack.c.b16 %v1044, %v1043
        %v1058 = vpack.c.b16 %v1046, %v1045
        %v1059 = vpack.c.b16 %v1048, %v1047
        %v1060 = vpack.c.b16 %v1050, %v1049
        %v1061 = vpack.c.b16 %v1052, %v1051
        %v1062 = vpack.c.b16 %v1054, %v1053
        %1071 = vmatprep.subr.bf16.mxu0 0
        %1072 = vmatpush1.bf16.msra.mxu0 %v1062
        %1073 = vmatprep.subr.bf16.mxu0 0
        %1074 = vmatpush1.bf16.msra.mxu0 %v1061
        %1075 = vmatprep.subr.bf16.mxu0 0
        %1076 = vmatpush1.bf16.msra.mxu0 %v1060
        %1077 = vmatprep.subr.bf16.mxu0 0
        %1078 = vmatpush1.bf16.msra.mxu0 %v1059
        %1079 = vmatprep.subr.bf16.mxu0 0
        %1080 = vmatpush1.bf16.msra.mxu0 %v1058
        %1081 = vmatprep.subr.bf16.mxu0 0
        %1082 = vmatpush1.bf16.msra.mxu0 %v1057
        %1083 = vmatprep.subr.bf16.mxu0 0
        %1084 = vmatpush1.bf16.msra.mxu0 %v1056
        %1085 = vmatprep.subr.bf16.mxu0 0
        %1086 = vmatpush1.bf16.msra.mxu0 %v1055
        %1087 = vmatprep.subr.bf16.mxu0 0
        %1088 = vmatpush2.bf16.msra.mxu0 0
        %1089 = vmatprep.subr.bf16.mxu0 0
        %1090 = vmatpush2.bf16.msra.mxu0 0
        %1091 = vmatprep.subr.bf16.mxu0 0
        %1092 = vmatpush2.bf16.msra.mxu0 0
        %1093 = vmatprep.subr.bf16.mxu0 0
        %1094 = vmatpush2.bf16.msra.mxu0 0
        %1095 = vmatprep.subr.bf16.mxu0 0
        %1096 = vmatpush2.bf16.msra.mxu0 0
        %1097 = vmatprep.subr.bf16.mxu0 0
        %1098 = vmatpush2.bf16.msra.mxu0 0
        %1099 = vmatprep.subr.bf16.mxu0 0
        %1100 = vmatpush2.bf16.msra.mxu0 0
        %1101 = vmatprep.subr.bf16.mxu0 0
        %1102 = vmatpush2.bf16.msra.mxu0 0
        %1103 = vmatprep.mubr.bf16.mxu0 0
        %1104 = vmatmul.mubr.bf16.gmra.mxu0 %v889
        %v1105 = vpop.f32.mrf.mxu0
        %v1106 = vadd.f32 %v1022, %v1105
        %v1107 = vpop.f32.mrf.mxu0
        %v1108 = vpop.f32.mrf.mxu0
        %v1109 = vadd.f32 %v1022, %v1108
        %v1110 = vpop.f32.mrf.mxu0
        %1111 = vdwg.mxu0
        %v1112 = vmax.f32 %v1106, 0.0
        %v1113 = vmax.f32 %v1109, 0.0
        %v1114 = vpack.c.bf16 %v1113, %v1112
        %v1115 = vld [vmem:[%s1 + $0x120] sm:$0xf]
        %v1116 = vld [vmem:[%s1 + $0x124] sm:$0xf]
        %v1117 = vld [vmem:[%s1 + $0x128] sm:$0xf]
        %v1118 = vld [vmem:[%s1 + $0x12c] sm:$0xf]
        %v1119 = vld [vmem:[%s1 + $0x130] sm:$0xf]
        %v1120 = vld [vmem:[%s1 + $0x134] sm:$0xf]
        %v1121 = vld [vmem:[%s1 + $0x138] sm:$0xf]
        %v1122 = vld [vmem:[%s1 + $0x13c] sm:$0xf]
        %v1123 = vld [vmem:[%s1 + $0x140] sm:$0xf]
        %v1124 = vld [vmem:[%s1 + $0x144] sm:$0xf]
        %v1125 = vld [vmem:[%s1 + $0x148] sm:$0xf]
        %v1126 = vld [vmem:[%s1 + $0x14c] sm:$0xf]
        %v1127 = vld [vmem:[%s1 + $0x150] sm:$0xf]
        %v1128 = vld [vmem:[%s1 + $0x154] sm:$0xf]
        %v1129 = vld [vmem:[%s1 + $0x158] sm:$0xf]
        %v1130 = vld [vmem:[%s1 + $0x15c] sm:$0xf]
        %v1131 = vlaneseq
        %v1132 = vshrl.u32 %v1131, 7
        %v1133 = vsub.s32 5, %v1132
        %v1134 = vrot.slane %v297, %v1133
        %v1151 = vunpack.c.l.b16 %v1115
        %v1152 = vunpack.c.l.b16 %v1116
        %v1153 = vunpack.c.l.b16 %v1117
        %v1154 = vunpack.c.l.b16 %v1118
        %v1155 = vunpack.c.l.b16 %v1119
        %v1156 = vunpack.c.l.b16 %v1120
        %v1157 = vunpack.c.l.b16 %v1121
        %v1158 = vunpack.c.l.b16 %v1122
        %v1159 = vunpack.c.l.b16 %v1123
        %v1160 = vunpack.c.l.b16 %v1124
        %v1161 = vunpack.c.l.b16 %v1125
        %v1162 = vunpack.c.l.b16 %v1126
        %v1163 = vunpack.c.l.b16 %v1127
        %v1164 = vunpack.c.l.b16 %v1128
        %v1165 = vunpack.c.l.b16 %v1129
        %v1166 = vunpack.c.l.b16 %v1130
        %v1167 = vpack.c.b16 %v1152, %v1151
        %v1168 = vpack.c.b16 %v1154, %v1153
        %v1169 = vpack.c.b16 %v1156, %v1155
        %v1170 = vpack.c.b16 %v1158, %v1157
        %v1171 = vpack.c.b16 %v1160, %v1159
        %v1172 = vpack.c.b16 %v1162, %v1161
        %v1173 = vpack.c.b16 %v1164, %v1163
        %v1174 = vpack.c.b16 %v1166, %v1165
        %1183 = vmatprep.subr.bf16.mxu0 0
        %1184 = vmatpush1.bf16.msra.mxu0 %v1174
        %1185 = vmatprep.subr.bf16.mxu0 0
        %1186 = vmatpush1.bf16.msra.mxu0 %v1173
        %1187 = vmatprep.subr.bf16.mxu0 0
        %1188 = vmatpush1.bf16.msra.mxu0 %v1172
        %1189 = vmatprep.subr.bf16.mxu0 0
        %1190 = vmatpush1.bf16.msra.mxu0 %v1171
        %1191 = vmatprep.subr.bf16.mxu0 0
        %1192 = vmatpush1.bf16.msra.mxu0 %v1170
        %1193 = vmatprep.subr.bf16.mxu0 0
        %1194 = vmatpush1.bf16.msra.mxu0 %v1169
        %1195 = vmatprep.subr.bf16.mxu0 0
        %1196 = vmatpush1.bf16.msra.mxu0 %v1168
        %1197 = vmatprep.subr.bf16.mxu0 0
        %1198 = vmatpush1.bf16.msra.mxu0 %v1167
        %1199 = vmatprep.subr.bf16.mxu0 0
        %1200 = vmatpush2.bf16.msra.mxu0 0
        %1201 = vmatprep.subr.bf16.mxu0 0
        %1202 = vmatpush2.bf16.msra.mxu0 0
        %1203 = vmatprep.subr.bf16.mxu0 0
        %1204 = vmatpush2.bf16.msra.mxu0 0
        %1205 = vmatprep.subr.bf16.mxu0 0
        %1206 = vmatpush2.bf16.msra.mxu0 0
        %1207 = vmatprep.subr.bf16.mxu0 0
        %1208 = vmatpush2.bf16.msra.mxu0 0
        %1209 = vmatprep.subr.bf16.mxu0 0
        %1210 = vmatpush2.bf16.msra.mxu0 0
        %1211 = vmatprep.subr.bf16.mxu0 0
        %1212 = vmatpush2.bf16.msra.mxu0 0
        %1213 = vmatprep.subr.bf16.mxu0 0
        %1214 = vmatpush2.bf16.msra.mxu0 0
        %1215 = vmatprep.mubr.bf16.mxu0 0
        %1216 = vmatmul.mubr.bf16.gmra.mxu0 %v890
        %v1217 = vpop.f32.mrf.mxu0
        %v1218 = vadd.f32 %v1134, %v1217
        %v1219 = vpop.f32.mrf.mxu0
        %v1220 = vpop.f32.mrf.mxu0
        %v1221 = vadd.f32 %v1134, %v1220
        %v1222 = vpop.f32.mrf.mxu0
        %1223 = vdwg.mxu0
        %v1224 = vmax.f32 %v1218, 0.0
        %v1225 = vmax.f32 %v1221, 0.0
        %v1226 = vpack.c.bf16 %v1225, %v1224
        %v1227 = vld [vmem:[%s1 + $0x160] sm:$0xf]
        %v1228 = vld [vmem:[%s1 + $0x164] sm:$0xf]
        %v1229 = vld [vmem:[%s1 + $0x168] sm:$0xf]
        %v1230 = vld [vmem:[%s1 + $0x16c] sm:$0xf]
        %v1231 = vld [vmem:[%s1 + $0x170] sm:$0xf]
        %v1232 = vld [vmem:[%s1 + $0x174] sm:$0xf]
        %v1233 = vld [vmem:[%s1 + $0x178] sm:$0xf]
        %v1234 = vld [vmem:[%s1 + $0x17c] sm:$0xf]
        %v1235 = vld [vmem:[%s1 + $0x180] sm:$0xf]
        %v1236 = vld [vmem:[%s1 + $0x184] sm:$0xf]
        %v1237 = vld [vmem:[%s1 + $0x188] sm:$0xf]
        %v1238 = vld [vmem:[%s1 + $0x18c] sm:$0xf]
        %v1239 = vld [vmem:[%s1 + $0x190] sm:$0xf]
        %v1240 = vld [vmem:[%s1 + $0x194] sm:$0xf]
        %v1241 = vld [vmem:[%s1 + $0x198] sm:$0xf]
        %v1242 = vld [vmem:[%s1 + $0x19c] sm:$0xf]
        %v1243 = vld [vmem:[%s1 + $0x1a0] sm:$0xf]
        %v1244 = vld [vmem:[%s1 + $0x1a4] sm:$0xf]
        %v1245 = vld [vmem:[%s1 + $0x1a8] sm:$0xf]
        %v1246 = vld [vmem:[%s1 + $0x1ac] sm:$0xf]
        %v1247 = vld [vmem:[%s1 + $0x1b0] sm:$0xf]
        %v1248 = vld [vmem:[%s1 + $0x1b4] sm:$0xf]
        %v1249 = vld [vmem:[%s1 + $0x1b8] sm:$0xf]
        %v1250 = vld [vmem:[%s1 + $0x1bc] sm:$0xf]
        %v1251 = vld [vmem:[%s1 + $0x1c0] sm:$0xf]
        %v1252 = vld [vmem:[%s1 + $0x1c4] sm:$0xf]
        %v1253 = vld [vmem:[%s1 + $0x1c8] sm:$0xf]
        %v1254 = vld [vmem:[%s1 + $0x1cc] sm:$0xf]
        %v1255 = vld [vmem:[%s1 + $0x1d0] sm:$0xf]
        %v1256 = vld [vmem:[%s1 + $0x1d4] sm:$0xf]
        %v1257 = vld [vmem:[%s1 + $0x1d8] sm:$0xf]
        %v1258 = vld [vmem:[%s1 + $0x1dc] sm:$0xf]
        %v1259 = vld [vmem:[%s1 + $0x1e0] sm:$0xf]
        %v1260 = vld [vmem:[%s1 + $0x1e4] sm:$0xf]
        %v1261 = vld [vmem:[%s1 + $0x1e8] sm:$0xf]
        %v1262 = vld [vmem:[%s1 + $0x1ec] sm:$0xf]
        %v1263 = vld [vmem:[%s1 + $0x1f0] sm:$0xf]
        %v1264 = vld [vmem:[%s1 + $0x1f4] sm:$0xf]
        %v1265 = vld [vmem:[%s1 + $0x1f8] sm:$0xf]
        %v1266 = vld [vmem:[%s1 + $0x1fc] sm:$0xf]
        %v1267 = vld [vmem:[%s1 + $0x200] sm:$0xf]
        %v1268 = vld [vmem:[%s1 + $0x204] sm:$0xf]
        %v1269 = vld [vmem:[%s1 + $0x208] sm:$0xf]
        %v1270 = vld [vmem:[%s1 + $0x20c] sm:$0xf]
        %v1271 = vld [vmem:[%s1 + $0x210] sm:$0xf]
        %v1272 = vld [vmem:[%s1 + $0x214] sm:$0xf]
        %v1273 = vld [vmem:[%s1 + $0x218] sm:$0xf]
        %v1274 = vld [vmem:[%s1 + $0x21c] sm:$0xf]
        %v1275 = vlaneseq
        %v1276 = vshrl.u32 %v1275, 7
        %v1277 = vsub.s32 6, %v1276
        %v1278 = vrot.slane %v297, %v1277
        %v1327 = vunpack.c.l.b16 %v1227
        %v1328 = vunpack.c.l.b16 %v1228
        %v1329 = vunpack.c.l.b16 %v1229
        %v1330 = vunpack.c.l.b16 %v1230
        %v1331 = vunpack.c.l.b16 %v1231
        %v1332 = vunpack.c.l.b16 %v1232
        %v1333 = vunpack.c.l.b16 %v1233
        %v1334 = vunpack.c.l.b16 %v1234
        %v1335 = vunpack.c.l.b16 %v1235
        %v1336 = vunpack.c.l.b16 %v1236
        %v1337 = vunpack.c.l.b16 %v1237
        %v1338 = vunpack.c.l.b16 %v1238
        %v1339 = vunpack.c.l.b16 %v1239
        %v1340 = vunpack.c.l.b16 %v1240
        %v1341 = vunpack.c.l.b16 %v1241
        %v1342 = vunpack.c.l.b16 %v1242
        %v1343 = vunpack.c.l.b16 %v1243
        %v1344 = vunpack.c.l.b16 %v1244
        %v1345 = vunpack.c.l.b16 %v1245
        %v1346 = vunpack.c.l.b16 %v1246
        %v1347 = vunpack.c.l.b16 %v1247
        %v1348 = vunpack.c.l.b16 %v1248
        %v1349 = vunpack.c.l.b16 %v1249
        %v1350 = vunpack.c.l.b16 %v1250
        %v1351 = vunpack.c.l.b16 %v1251
        %v1352 = vunpack.c.l.b16 %v1252
        %v1353 = vunpack.c.l.b16 %v1253
        %v1354 = vunpack.c.l.b16 %v1254
        %v1355 = vunpack.c.l.b16 %v1255
        %v1356 = vunpack.c.l.b16 %v1256
        %v1357 = vunpack.c.l.b16 %v1257
        %v1358 = vunpack.c.l.b16 %v1258
        %v1359 = vunpack.c.l.b16 %v1259
        %v1360 = vunpack.c.l.b16 %v1260
        %v1361 = vunpack.c.l.b16 %v1261
        %v1362 = vunpack.c.l.b16 %v1262
        %v1363 = vunpack.c.l.b16 %v1263
        %v1364 = vunpack.c.l.b16 %v1264
        %v1365 = vunpack.c.l.b16 %v1265
        %v1366 = vunpack.c.l.b16 %v1266
        %v1367 = vunpack.c.l.b16 %v1267
        %v1368 = vunpack.c.l.b16 %v1268
        %v1369 = vunpack.c.l.b16 %v1269
        %v1370 = vunpack.c.l.b16 %v1270
        %v1371 = vunpack.c.l.b16 %v1271
        %v1372 = vunpack.c.l.b16 %v1272
        %v1373 = vunpack.c.l.b16 %v1273
        %v1374 = vunpack.c.l.b16 %v1274
        %v1375 = vpack.c.b16 %v1328, %v1327
        %v1376 = vpack.c.b16 %v1330, %v1329
        %v1377 = vpack.c.b16 %v1332, %v1331
        %v1378 = vpack.c.b16 %v1334, %v1333
        %v1379 = vpack.c.b16 %v1336, %v1335
        %v1380 = vpack.c.b16 %v1338, %v1337
        %v1381 = vpack.c.b16 %v1340, %v1339
        %v1382 = vpack.c.b16 %v1342, %v1341
        %v1383 = vpack.c.b16 %v1344, %v1343
        %v1384 = vpack.c.b16 %v1346, %v1345
        %v1385 = vpack.c.b16 %v1348, %v1347
        %v1386 = vpack.c.b16 %v1350, %v1349
        %v1387 = vpack.c.b16 %v1352, %v1351
        %v1388 = vpack.c.b16 %v1354, %v1353
        %v1389 = vpack.c.b16 %v1356, %v1355
        %v1390 = vpack.c.b16 %v1358, %v1357
        %v1391 = vpack.c.b16 %v1360, %v1359
        %v1392 = vpack.c.b16 %v1362, %v1361
        %v1393 = vpack.c.b16 %v1364, %v1363
        %v1394 = vpack.c.b16 %v1366, %v1365
        %v1395 = vpack.c.b16 %v1368, %v1367
        %v1396 = vpack.c.b16 %v1370, %v1369
        %v1397 = vpack.c.b16 %v1372, %v1371
        %v1398 = vpack.c.b16 %v1374, %v1373
        %1423 = vmatprep.subr.bf16.mxu0 0
        %1424 = vmatpush1.bf16.msra.mxu0 %v1382
        %1425 = vmatprep.subr.bf16.mxu0 0
        %1426 = vmatpush1.bf16.msra.mxu0 %v1381
        %1427 = vmatprep.subr.bf16.mxu0 0
        %1428 = vmatpush1.bf16.msra.mxu0 %v1380
        %1429 = vmatprep.subr.bf16.mxu0 0
        %1430 = vmatpush1.bf16.msra.mxu0 %v1379
        %1431 = vmatprep.subr.bf16.mxu0 0
        %1432 = vmatpush1.bf16.msra.mxu0 %v1378
        %1433 = vmatprep.subr.bf16.mxu0 0
        %1434 = vmatpush1.bf16.msra.mxu0 %v1377
        %1435 = vmatprep.subr.bf16.mxu0 0
        %1436 = vmatpush1.bf16.msra.mxu0 %v1376
        %1437 = vmatprep.subr.bf16.mxu0 0
        %1438 = vmatpush1.bf16.msra.mxu0 %v1375
        %1439 = vmatprep.subr.bf16.mxu0 0
        %1440 = vmatpush2.bf16.msra.mxu0 %v1390
        %1441 = vmatprep.subr.bf16.mxu0 0
        %1442 = vmatpush2.bf16.msra.mxu0 %v1389
        %1443 = vmatprep.subr.bf16.mxu0 0
        %1444 = vmatpush2.bf16.msra.mxu0 %v1388
        %1445 = vmatprep.subr.bf16.mxu0 0
        %1446 = vmatpush2.bf16.msra.mxu0 %v1387
        %1447 = vmatprep.subr.bf16.mxu0 0
        %1448 = vmatpush2.bf16.msra.mxu0 %v1386
        %1449 = vmatprep.subr.bf16.mxu0 0
        %1450 = vmatpush2.bf16.msra.mxu0 %v1385
        %1451 = vmatprep.subr.bf16.mxu0 0
        %1452 = vmatpush2.bf16.msra.mxu0 %v1384
        %1453 = vmatprep.subr.bf16.mxu0 0
        %1454 = vmatpush2.bf16.msra.mxu0 %v1383
        %1455 = vmatprep.mubr.bf16.mxu0 %v1114
        %1456 = vmatmul.mubr.bf16.gmra.mxu0 %v1002
        %v1457 = vpop.f32.mrf.mxu0
        %v1458 = vadd.f32 %v1278, %v1457
        %v1459 = vpop.f32.mrf.mxu0
        %v1460 = vpop.f32.mrf.mxu0
        %v1461 = vadd.f32 %v1278, %v1460
        %v1462 = vpop.f32.mrf.mxu0
        %1463 = vdwg.mxu0
        %1464 = vmatprep.subr.bf16.mxu0 0
        %1465 = vmatpush1.bf16.msra.mxu0 %v1398
        %1466 = vmatprep.subr.bf16.mxu0 0
        %1467 = vmatpush1.bf16.msra.mxu0 %v1397
        %1468 = vmatprep.subr.bf16.mxu0 0
        %1469 = vmatpush1.bf16.msra.mxu0 %v1396
        %1470 = vmatprep.subr.bf16.mxu0 0
        %1471 = vmatpush1.bf16.msra.mxu0 %v1395
        %1472 = vmatprep.subr.bf16.mxu0 0
        %1473 = vmatpush1.bf16.msra.mxu0 %v1394
        %1474 = vmatprep.subr.bf16.mxu0 0
        %1475 = vmatpush1.bf16.msra.mxu0 %v1393
        %1476 = vmatprep.subr.bf16.mxu0 0
        %1477 = vmatpush1.bf16.msra.mxu0 %v1392
        %1478 = vmatprep.subr.bf16.mxu0 0
        %1479 = vmatpush1.bf16.msra.mxu0 %v1391
        %1480 = vmatprep.subr.bf16.mxu0 0
        %1481 = vmatpush2.bf16.msra.mxu0 0
        %1482 = vmatprep.subr.bf16.mxu0 0
        %1483 = vmatpush2.bf16.msra.mxu0 0
        %1484 = vmatprep.subr.bf16.mxu0 0
        %1485 = vmatpush2.bf16.msra.mxu0 0
        %1486 = vmatprep.subr.bf16.mxu0 0
        %1487 = vmatpush2.bf16.msra.mxu0 0
        %1488 = vmatprep.subr.bf16.mxu0 0
        %1489 = vmatpush2.bf16.msra.mxu0 0
        %1490 = vmatprep.subr.bf16.mxu0 0
        %1491 = vmatpush2.bf16.msra.mxu0 0
        %1492 = vmatprep.subr.bf16.mxu0 0
        %1493 = vmatpush2.bf16.msra.mxu0 0
        %1494 = vmatprep.subr.bf16.mxu0 0
        %1495 = vmatpush2.bf16.msra.mxu0 0
        %1496 = vmatprep.mubr.bf16.mxu0 0
        %1497 = vmatmul.mubr.bf16.gmra.mxu0 %v1226
        %v1498 = vpop.f32.mrf.mxu0
        %v1499 = vadd.f32 %v1458, %v1498
        %v1500 = vpop.f32.mrf.mxu0
        %v1501 = vpop.f32.mrf.mxu0
        %v1502 = vadd.f32 %v1461, %v1501
        %v1503 = vpop.f32.mrf.mxu0
        %1504 = vdwg.mxu0
        %v1505 = vmax.f32 %v1499, 0.0
        %v1506 = vmax.f32 %v1502, 0.0
        %v1507 = vsel %vm300, 1, 0
        %v1508 = vlaneseq
        %v1509 = vshrl.u32 %v1508, 7
        %v1510 = vsub.s32 7, %v1509
        %v1511 = vrot.slane %v1507, %v1510
        %vm1512 = vcmp.eq.s32.totalorder %v1511, 1
        %v1513 = vsel %vm1512, %v1505, %v1499
        %v1514 = vsel %vm1512, %v1506, %v1502
        %1515 = vst [vmem:[%s294] sm:$0xff] %v1513
        %1516 = vst [vmem:[%s294 + $0x8] sm:$0xff] %v1514
        %s1517 = sand.u32 %s117, 1
        %s1518 = scalar_lea.sflag [#allocation4], %s1517
        %s1519 = sand.u32 %s117, 1
        %s1520 = smul.addr %s1519, 16
        %s1521 = scalar_lea.vmem [#allocation3], %s1520
        %s1522 = smul.u32 2, %s20
        %p1523 = scmp.lt.s32.totalorder %s1522, 3
        %s1524 = scalar_select %p1523, %s1522, 3
        %s1525 = smul.addr %s1524, 8
        %s1526 = scalar_lea.vmem %s5, %s1525
        // Predicated region
        $region75: #{dd3d_video_prediction4_forward.1} parent=69 // pred_check
          %p1527 = pneg %p127
        $region76: #{dd3d_video_prediction4_forward.1} parent=69 // pred_check_branch
          %1529 = sbr.rel (%p1527) target = $region78
        $region77: #{dd3d_video_prediction4_forward.1} parent=69 // pred_region
          %s1530 = smul.u32 2, %s20
          %s1532 = ssub.s32 256, 256
          %1533 = vsyncadd %s1518, %s1532
          %s1534 = smul.addr %s1530, 128
          %s1535 = scalar_lea.hbm %s4, %s1534
          %s1536 = sshll.u32 %s1521, 4
          %s1537 = int_to_ptr.vmem [resolvable:$true] %s1536
          %1542 = dma.vmem_to_hbm [thread:$0]  %s1537, 256, %s1535, %s1518, 128, 128, 8
        $region78: #{dd3d_video_prediction4_forward.1} parent=69 // pred_fallthru
          _
        // Predicated region
        $region79: #{dd3d_video_prediction4_forward.1} parent=69 // pred_check
          %p1543 = pneg %p153
        $region80: #{dd3d_video_prediction4_forward.1} parent=69 // pred_check_branch
          %1545 = sbr.rel (%p1543) target = $region82
        $region81: #{dd3d_video_prediction4_forward.1} parent=69 // pred_region
          %s1546 = smul.u32 2, %s20
        $region82: #{dd3d_video_prediction4_forward.1} parent=69 // pred_fallthru
          _
      $region70: #{dd3d_video_prediction4_forward.1} parent=5 // pred_fallthru
        _
      %p1547 = scmp.le.s32.totalorder 2, %s15
      // Predicated region
      $region83: #{dd3d_video_prediction4_forward.1} parent=5 // pred_check
        %p1548 = pneg %p1547
      $region84: #{dd3d_video_prediction4_forward.1} parent=5 // pred_check_branch
        %1550 = sbr.rel (%p1548) target = $region86
      $region85: #{dd3d_video_prediction4_forward.1} parent=5 // pred_region
        %s1551 = ssub.s32 %s15, 2
        // Predicated region
        $region87: #{dd3d_video_prediction4_forward.1} parent=85 // pred_check
          %p1552 = pneg %p133
        $region88: #{dd3d_video_prediction4_forward.1} parent=85 // pred_check_branch
          %1554 = sbr.rel (%p1552) target = $region90
        $region89: #{dd3d_video_prediction4_forward.1} parent=85 // pred_region
          %s1555 = sand.u32 %s118, 1
          %s1556 = scalar_lea.sflag [#allocation4], %s1555
          %s1557 = sand.u32 %s118, 1
          %s1558 = smul.addr %s1557, 16
          %s1559 = scalar_lea.vmem [#allocation3], %s1558
          %1560 = dma.done %s1556, 256
        $region90: #{dd3d_video_prediction4_forward.1} parent=85 // pred_fallthru
          _
        // Predicated region
        $region91: #{dd3d_video_prediction4_forward.1} parent=85 // pred_check
          %p1561 = pneg %p159
        $region92: #{dd3d_video_prediction4_forward.1} parent=85 // pred_check_branch
          %1563 = sbr.rel (%p1561) target = $region94
        $region93: #{dd3d_video_prediction4_forward.1} parent=85 // pred_region
          %s1564 = smul.u32 2, %s21
          %p1565 = scmp.lt.s32.totalorder %s1564, 3
          %s1566 = scalar_select %p1565, %s1564, 3
          %s1567 = smul.addr %s1566, 8
          %s1568 = scalar_lea.vmem %s5, %s1567
        $region94: #{dd3d_video_prediction4_forward.1} parent=85 // pred_fallthru
          _
      $region86: #{dd3d_video_prediction4_forward.1} parent=5 // pred_fallthru
        _
    $region6: #{dd3d_video_prediction4_forward.1} parent=1 // loop_footer
      %s19 = sadd.s32 1, %s15
    $region7: #{dd3d_video_prediction4_forward.1} parent=1 // loop_footer_branch
      %14 = sbr.rel target = $region3
    $region8: #{dd3d_video_prediction4_forward.1} parent=1 // loop_exit
      _
    %1569 = vsyncpa [#allocation4], 1
    %s1570 = scalar_lea.sflag [#allocation4], 1
    %1571 = vsyncpa %s1570, 1

</llo_original>
